<compile_context>
chip_gen: v7x
topology: tpu7x:2x2x1
jax: 0.10.0
libtpu: 0.0.40
codegen_flags: <defaults>
</compile_context>

<pallas_src>
import functools

import jax
import jax.numpy as jnp
from jax.experimental import pallas as pl
from jax.experimental.pallas import tpu as pltpu


# ----------------------- DefaultConfig surrogate -----------------------
class Cfg:
    neighbor_sample_size = 8
    window = 8
    neighbors_head_config = [2]
    neighbors_layer_config = [16]
    temporal_head_config = [4]
    temporal_layer_config = [32]


cfg = Cfg()

NODE_DIM = 16
EDGE_DIM = 8
USE_EDGE = True


def _round_up(x, m):
    return ((x + m - 1) // m) * m


# ----------------------- Neighbors attention kernel -----------------------
def _neighbors_kernel(K, n_heads, x_ref, ngh_ref, wn_ref, wngh_ref,
                      a_self_ref, a_ngh_ref, out_ref):
    x = x_ref[...]                        # (TB, Dn)
    nf = ngh_ref[...]                     # (TB*K, F)   F = Dn(+De)
    wn = wn_ref[...]                      # (Dn, Do)
    wng = wngh_ref[...]                   # (F, Do)     stacked node(+edge) weight
    a_s = a_self_ref[...]                 # (1, Do)
    a_n = a_ngh_ref[...]                  # (1, Do)

    TB = x.shape[0]
    Do = wn.shape[1]
    dh = Do // n_heads

    # projections (single fused matmul for neighbors: node feats + edge feats)
    h_self = jnp.dot(x, wn, preferred_element_type=jnp.float32)     # (TB, Do)
    h_ngh = jnp.dot(nf, wng, preferred_element_type=jnp.float32)    # (TB*K, Do)
    h_ngh3 = h_ngh.reshape(TB, K, Do)                               # major-dim split

    ws = h_self * a_s                                               # (TB, Do)
    wg = (h_ngh * a_n).reshape(TB, K, Do)                           # (TB, K, Do)

    # per-head GAT attention over K neighbors (n_heads is tiny & static)
    agg_parts = []
    for h in range(n_heads):
        sl = slice(h * dh, (h + 1) * dh)
        logit_self = jnp.sum(ws[:, sl], axis=-1, keepdims=True)     # (TB, 1)
        logit_ngh = jnp.sum(wg[:, :, sl], axis=-1)                  # (TB, K)
        e = logit_self + logit_ngh
        e = jnp.where(e > 0, e, 0.2 * e)                            # LeakyReLU(0.2)
        e = e - jnp.max(e, axis=-1, keepdims=True)
        p = jnp.exp(e)
        denom = jnp.sum(p, axis=-1, keepdims=True)
        alpha = p * pl.reciprocal(denom, approx=True)               # softmax over K
        agg_parts.append(
            jnp.sum(alpha[:, :, None] * h_ngh3[:, :, sl], axis=1))  # (TB, dh)
    agg = jnp.concatenate(agg_parts, axis=-1)                       # (TB, Do)

    def elu(v):
        return jnp.where(v > 0, v, jnp.exp(v) - 1.0)

    # single lane-dense store of concat([self_emb, ngh_agg])
    out_ref[...] = jnp.concatenate([elu(h_self), elu(agg)],
                                   axis=-1).astype(out_ref.dtype)


def neighbors_attention(x, ngh_feat, w_node, w_ngh, a_self, a_ngh, *,
                        n_heads, K, tile_b=1024):
    """x: (Bf, Dn); ngh_feat: (Bf*K, F) flattened neighbor(+edge) features."""
    Bf, Dn = x.shape
    F = ngh_feat.shape[1]
    Do = w_node.shape[1]

    tile_b = min(tile_b, _round_up(Bf, 8))
    Bf_pad = _round_up(Bf, tile_b)
    if Bf_pad != Bf:
        x = jnp.pad(x, ((0, Bf_pad - Bf), (0, 0)))
        ngh_feat = jnp.pad(ngh_feat, ((0, (Bf_pad - Bf) * K), (0, 0)))

    grid = (Bf_pad // tile_b,)
    kernel = functools.partial(_neighbors_kernel, K, n_heads)
    out = pl.pallas_call(
        kernel,
        out_shape=jax.ShapeDtypeStruct((Bf_pad, 2 * Do), jnp.float32),
        grid_spec=pltpu.PrefetchScalarGridSpec(
            num_scalar_prefetch=0,
            grid=grid,
            in_specs=[
                pl.BlockSpec((tile_b, Dn), lambda i: (i, 0)),
                pl.BlockSpec((tile_b * K, F), lambda i: (i, 0)),
                pl.BlockSpec((Dn, Do), lambda i: (0, 0)),
                pl.BlockSpec((F, Do), lambda i: (0, 0)),
                pl.BlockSpec((1, Do), lambda i: (0, 0)),
                pl.BlockSpec((1, Do), lambda i: (0, 0)),
            ],
            out_specs=pl.BlockSpec((tile_b, 2 * Do), lambda i: (i, 0)),
        ),
        compiler_params=pltpu.CompilerParams(dimension_semantics=("parallel",)),
    )(x, ngh_feat, w_node, w_ngh, a_self, a_ngh)
    return out[:Bf]


# ------------- Temporal attention + fused prediction head kernel -------------
def _temporal_head_kernel(n_heads, x_ref, pos_ref, mask_ref, wqkv_ref,
                          we_ref, be_ref, wf_ref, bf_ref, emb_ref, prob_ref):
    x = x_ref[...] + pos_ref[...][None, :, :]        # (NB, T, Din)
    NB, T, Din = x.shape
    wqkv = wqkv_ref[...]                             # (Din, 3*Do)
    Do = wqkv.shape[1] // 3
    dh = Do // n_heads

    xf = x.reshape(NB * T, Din)
    qkv = jnp.dot(xf, wqkv, preferred_element_type=jnp.float32)   # (NB*T, 3*Do)
    q = qkv[:, :Do].reshape(NB, T, Do)
    k = qkv[:, Do:2 * Do].reshape(NB, T, Do)
    v = qkv[:, 2 * Do:].reshape(NB, T, Do)

    mask = mask_ref[...][None, :, :]                 # (1, T, T) additive causal bias
    scale = 1.0 / (float(dh) ** 0.5)

    # NOTE: with the single temporal layer in this config only the t = T-1 row
    # is consumed downstream, so the kernel emits just the last-step embeddings
    # (full causal attention is still computed per head).
    last_parts = []
    for h in range(n_heads):
        sl = slice(h * dh, (h + 1) * dh)
        qh = q[:, :, sl]
        kh = k[:, :, sl]
        vh = v[:, :, sl]
        s = jnp.einsum("ntd,nsd->nts", qh, kh,
                       preferred_element_type=jnp.float32) * scale
        s = s + mask
        s = s - jnp.max(s, axis=-1, keepdims=True)
        p = jnp.exp(s)
        denom = jnp.sum(p, axis=-1, keepdims=True)
        a = p * pl.reciprocal(denom, approx=True)
        oh = jnp.einsum("nts,nsd->ntd", a, vh,
                        preferred_element_type=jnp.float32)       # (NB, T, dh)
        last_parts.append(oh[:, T - 1, :])                        # (NB, dh)

    final = jnp.concatenate(last_parts, axis=-1)                  # (NB, Do)
    emb_ref[...] = final.astype(emb_ref.dtype)

    # fused prediction head: embed -> fc -> sigmoid
    e = jnp.dot(final, we_ref[...], preferred_element_type=jnp.float32) + be_ref[...]
    logit = jnp.dot(e, wf_ref[...], preferred_element_type=jnp.float32) + bf_ref[...]
    prob_ref[...] = jax.nn.sigmoid(logit).astype(prob_ref.dtype)


def temporal_attention_head(x, pos, mask_bias, w_qkv, w_embed, b_embed, w_fc,
                            b_fc, *, n_heads, tile_n=128):
    N, T, Din = x.shape
    Do = w_qkv.shape[1] // 3

    tile_n = min(tile_n, _round_up(N, 8))
    N_pad = _round_up(N, tile_n)
    if N_pad != N:
        x = jnp.pad(x, ((0, N_pad - N), (0, 0), (0, 0)))

    grid = (N_pad // tile_n,)
    kernel = functools.partial(_temporal_head_kernel, n_heads)
    emb, prob = pl.pallas_call(
        kernel,
        out_shape=(jax.ShapeDtypeStruct((N_pad, Do), jnp.float32),
                   jax.ShapeDtypeStruct((N_pad, 1), jnp.float32)),
        grid_spec=pltpu.PrefetchScalarGridSpec(
            num_scalar_prefetch=0,
            grid=grid,
            in_specs=[
                pl.BlockSpec((tile_n, T, Din), lambda i: (i, 0, 0)),
                pl.BlockSpec((T, Din), lambda i: (0, 0)),
                pl.BlockSpec((T, T), lambda i: (0, 0)),
                pl.BlockSpec((Din, 3 * Do), lambda i: (0, 0)),
                pl.BlockSpec((Do, 8), lambda i: (0, 0)),
                pl.BlockSpec((1, 8), lambda i: (0, 0)),
                pl.BlockSpec((8, 1), lambda i: (0, 0)),
                pl.BlockSpec((1, 1), lambda i: (0, 0)),
            ],
            out_specs=(pl.BlockSpec((tile_n, Do), lambda i: (i, 0)),
                       pl.BlockSpec((tile_n, 1), lambda i: (i, 0))),
        ),
        compiler_params=pltpu.CompilerParams(dimension_semantics=("parallel",)),
    )(x, pos, mask_bias, w_qkv, w_embed, b_embed, w_fc, b_fc)
    return emb[:N], prob[:N]


# ----------------------- Parameter init -----------------------
def init_params(key):
    ks = jax.random.split(key, 10)
    Do_n = cfg.neighbors_layer_config[0]
    Din_t = 2 * Do_n
    Do_t = cfg.temporal_layer_config[0]

    ngh = {
        "w_node": 0.1 * jax.random.normal(ks[0], (NODE_DIM, Do_n), jnp.float32),
        "w_edge": 0.1 * jax.random.normal(ks[1], (EDGE_DIM, Do_n), jnp.float32),
        "a_self": 0.1 * jax.random.normal(ks[2], (1, Do_n), jnp.float32),
        "a_ngh": 0.1 * jax.random.normal(ks[3], (1, Do_n), jnp.float32),
    }
    temp = {
        "pos": 0.1 * jax.random.normal(ks[4], (cfg.window, Din_t), jnp.float32),
        "wq": 0.1 * jax.random.normal(ks[5], (Din_t, Do_t), jnp.float32),
        "wk": 0.1 * jax.random.normal(ks[6], (Din_t, Do_t), jnp.float32),
        "wv": 0.1 * jax.random.normal(ks[7], (Din_t, Do_t), jnp.float32),
    }
    head = {
        "w_embed": 0.1 * jax.random.normal(ks[8], (Do_t, 8), jnp.float32),
        "b_embed": jnp.zeros((1, 8), jnp.float32),
        "w_fc": 0.1 * jax.random.normal(ks[9], (8, 1), jnp.float32),
        "b_fc": jnp.zeros((1, 1), jnp.float32),
    }
    return {"ngh": ngh, "temp": temp, "head": head}


# ----------------------- HADGA forward (glue) -----------------------
def hadga_forward(placeholders, params, training=False):
    feats = placeholders["features"]                 # (N, T, node_dim)
    ngh_x = placeholders["ngh_node_features"]        # (N, T, K, node_dim)
    ngh_e = placeholders["ngh_edge_features"]        # (N, T, K, edge_dim)
    N, T, Dn = feats.shape
    K = cfg.neighbor_sample_size

    flat_x = feats.reshape(-1, Dn)                   # (Bf, Dn)

    # Fuse node+edge neighbor features / weights for a single matmul per tile.
    if USE_EDGE:
        ngh_feat = jnp.concatenate([ngh_x, ngh_e], axis=-1).reshape(-1, Dn + EDGE_DIM)
        w_ngh = jnp.concatenate(
            [params["ngh"]["w_node"], params["ngh"]["w_edge"]], axis=0)
    else:
        ngh_feat = ngh_x.reshape(-1, Dn)
        w_ngh = params["ngh"]["w_node"]

    # single neighbors layer (config has one entry); dropout is identity (eval)
    ngh_out = neighbors_attention(
        flat_x, ngh_feat, params["ngh"]["w_node"], w_ngh,
        params["ngh"]["a_self"], params["ngh"]["a_ngh"],
        n_heads=cfg.neighbors_head_config[0], K=K, tile_b=1024)

    temporal_in = ngh_out.reshape(N, T, cfg.neighbors_layer_config[-1] * 2)

    # fused Q/K/V weight and precomputed causal mask bias
    w_qkv = jnp.concatenate(
        [params["temp"]["wq"], params["temp"]["wk"], params["temp"]["wv"]], axis=1)
    row = jnp.arange(T)[:, None]
    col = jnp.arange(T)[None, :]
    mask_bias = jnp.where(col <= row, 0.0, -1e9).astype(jnp.float32)

    # single temporal layer + fused prediction head
    final_output_embeddings, probs = temporal_attention_head(
        temporal_in, params["temp"]["pos"], mask_bias, w_qkv,
        params["head"]["w_embed"], params["head"]["b_embed"],
        params["head"]["w_fc"], params["head"]["b_fc"],
        n_heads=cfg.temporal_head_config[0], tile_n=128)

    pred_y = jnp.squeeze(jnp.round(probs).astype(jnp.int32), axis=-1)

    # scatter predictions into batch-sized vector via remain_index (plain JAX)
    remain_index = placeholders["remain_index"]
    batch_label = placeholders["batch_label"]
    pred_full = jnp.zeros((batch_label.shape[0],), jnp.float32)
    pred_full = pred_full.at[remain_index].set(pred_y.astype(jnp.float32))

    return pred_full, final_output_embeddings


# ----------------------- Demo -----------------------
if __name__ == "__main__":
    key = jax.random.PRNGKey(0)
    k_feat, k_ngh, k_edge, k_par = jax.random.split(key, 4)

    N, T, K = 4, cfg.window, cfg.neighbor_sample_size
    placeholders = {
        "features": jax.random.normal(k_feat, (N, T, NODE_DIM), jnp.float32),
        "ngh_node_features": jax.random.normal(k_ngh, (N, T, K, NODE_DIM), jnp.float32),
        "ngh_edge_features": jax.random.normal(k_edge, (N, T, K, EDGE_DIM), jnp.float32),
        "spatial_drop": 0.0,
        "temporal_drop": 0.0,
        "label": jnp.array([0, 1, 0, 1], jnp.int32),
        "remain_index": jnp.arange(N, dtype=jnp.int32),
        "batch_label": jnp.zeros((6,), jnp.int32),
    }
    params = init_params(k_par)

    pred_y, final_embeds = hadga_forward(placeholders, params, training=False)
    jax.block_until_ready(pred_y)
    jax.block_until_ready(final_embeds)
    assert pred_y.shape == (6,)
    assert final_embeds.shape == (N, cfg.temporal_layer_config[-1])
    print("KERNEL_OK")
</pallas_src>

<mosaic_0001>
module attributes {stable_mosaic.version = 11 : i64} {
  func.func @_neighbors_kernel(%arg0: i32, %arg1: memref<32x16xf32, #tpu.memory_space<vmem>>, %arg2: memref<256x24xf32, #tpu.memory_space<vmem>>, %arg3: memref<16x16xf32, #tpu.memory_space<vmem>>, %arg4: memref<24x16xf32, #tpu.memory_space<vmem>>, %arg5: memref<1x16xf32, #tpu.memory_space<vmem>>, %arg6: memref<1x16xf32, #tpu.memory_space<vmem>>, %arg7: memref<32x32xf32, #tpu.memory_space<vmem>>) attributes {dimension_semantics = [#tpu.dimension_semantics<parallel>], iteration_bounds = array<i64: 1>, scalar_prefetch = 0 : i64, scratch_operands = 0 : i64, tpu.core_type = #tpu.core_type<tc>, window_params = [{transform_indices = @transform_0, window_bounds = array<i64: 32, 16>}, {transform_indices = @transform_1, window_bounds = array<i64: 256, 24>}, {pipeline_mode = #tpu.pipeline_mode<synchronous>, transform_indices = @transform_2, window_bounds = array<i64: 16, 16>}, {pipeline_mode = #tpu.pipeline_mode<synchronous>, transform_indices = @transform_3, window_bounds = array<i64: 24, 16>}, {pipeline_mode = #tpu.pipeline_mode<synchronous>, transform_indices = @transform_4, window_bounds = array<i64: 1, 16>}, {pipeline_mode = #tpu.pipeline_mode<synchronous>, transform_indices = @transform_5, window_bounds = array<i64: 1, 16>}, {transform_indices = @transform_6, window_bounds = array<i64: 32, 32>}]} {
    %c0 = arith.constant 0 : index
    %c0_0 = arith.constant 0 : index
    %0 = vector.load %arg1[%c0, %c0_0] : memref<32x16xf32, #tpu.memory_space<vmem>>, vector<32x16xf32>
    %c0_1 = arith.constant 0 : index
    %c0_2 = arith.constant 0 : index
    %1 = vector.load %arg2[%c0_1, %c0_2] : memref<256x24xf32, #tpu.memory_space<vmem>>, vector<256x24xf32>
    %c0_3 = arith.constant 0 : index
    %c0_4 = arith.constant 0 : index
    %2 = vector.load %arg3[%c0_3, %c0_4] : memref<16x16xf32, #tpu.memory_space<vmem>>, vector<16x16xf32>
    %c0_5 = arith.constant 0 : index
    %c0_6 = arith.constant 0 : index
    %3 = vector.load %arg4[%c0_5, %c0_6] : memref<24x16xf32, #tpu.memory_space<vmem>>, vector<24x16xf32>
    %c0_7 = arith.constant 0 : index
    %c0_8 = arith.constant 0 : index
    %4 = vector.load %arg5[%c0_7, %c0_8] : memref<1x16xf32, #tpu.memory_space<vmem>>, vector<1x16xf32>
    %c0_9 = arith.constant 0 : index
    %c0_10 = arith.constant 0 : index
    %5 = vector.load %arg6[%c0_9, %c0_10] : memref<1x16xf32, #tpu.memory_space<vmem>>, vector<1x16xf32>
    %cst = arith.constant dense<0.000000e+00> : vector<32x16xf32>
    %6 = tpu.matmul %0, %2, %cst {dimension_numbers = #tpu.dot_dimension_numbers<[1], [0], [0], [1], [0, 0, 1, 1], [], []>} : vector<32x16xf32>, vector<16x16xf32>, vector<32x16xf32> -> vector<32x16xf32>
    %cst_11 = arith.constant dense<0.000000e+00> : vector<256x16xf32>
    %7 = tpu.matmul %1, %3, %cst_11 {dimension_numbers = #tpu.dot_dimension_numbers<[1], [0], [0], [1], [0, 0, 1, 1], [], []>} : vector<256x24xf32>, vector<24x16xf32>, vector<256x16xf32> -> vector<256x16xf32>
    %8 = vector.shape_cast %7 : vector<256x16xf32> to vector<32x8x16xf32>
    %9 = vector.broadcast %4 : vector<1x16xf32> to vector<32x16xf32>
    %10 = arith.mulf %6, %9 : vector<32x16xf32>
    %11 = vector.broadcast %5 : vector<1x16xf32> to vector<256x16xf32>
    %12 = arith.mulf %7, %11 : vector<256x16xf32>
    %13 = vector.shape_cast %12 : vector<256x16xf32> to vector<32x8x16xf32>
    %14 = vector.extract_strided_slice %10 {offsets = [0, 0], sizes = [32, 8], strides = [1, 1]} : vector<32x16xf32> to vector<32x8xf32>
    %cst_12 = arith.constant dense<0.000000e+00> : vector<32xf32>
    %15 = vector.multi_reduction <add>, %14, %cst_12 [1] : vector<32x8xf32> to vector<32xf32>
    %16 = vector.shape_cast %15 : vector<32xf32> to vector<32x1xf32>
    %17 = vector.extract_strided_slice %13 {offsets = [0, 0, 0], sizes = [32, 8, 8], strides = [1, 1, 1]} : vector<32x8x16xf32> to vector<32x8x8xf32>
    %cst_13 = arith.constant dense<0.000000e+00> : vector<32x8xf32>
    %18 = vector.multi_reduction <add>, %17, %cst_13 [2] : vector<32x8x8xf32> to vector<32x8xf32>
    %19 = vector.broadcast %16 : vector<32x1xf32> to vector<32x8xf32>
    %20 = arith.addf %19, %18 : vector<32x8xf32>
    %cst_14 = arith.constant 0.000000e+00 : f32
    %21 = vector.broadcast %cst_14 : f32 to vector<32x8xf32>
    %22 = arith.cmpf ogt, %20, %21 : vector<32x8xf32>
    %cst_15 = arith.constant 2.000000e-01 : f32
    %23 = vector.broadcast %cst_15 : f32 to vector<32x8xf32>
    %24 = arith.mulf %23, %20 : vector<32x8xf32>
    %25 = arith.select %22, %20, %24 : vector<32x8xi1>, vector<32x8xf32>
    %cst_16 = arith.constant dense<0xFF800000> : vector<32xf32>
    %26 = vector.multi_reduction <maximumf>, %25, %cst_16 [1] : vector<32x8xf32> to vector<32xf32>
    %27 = vector.shape_cast %26 : vector<32xf32> to vector<32x1xf32>
    %28 = vector.broadcast %27 : vector<32x1xf32> to vector<32x8xf32>
    %29 = arith.subf %25, %28 : vector<32x8xf32>
    %30 = math.exp %29 : vector<32x8xf32>
    %cst_17 = arith.constant dense<0.000000e+00> : vector<32xf32>
    %31 = vector.multi_reduction <add>, %30, %cst_17 [1] : vector<32x8xf32> to vector<32xf32>
    %32 = vector.shape_cast %31 : vector<32xf32> to vector<32x1xf32>
    %33 = tpu.reciprocal %32 {approx = true} : vector<32x1xf32> -> vector<32x1xf32>
    %34 = vector.broadcast %33 : vector<32x1xf32> to vector<32x8xf32>
    %35 = arith.mulf %30, %34 : vector<32x8xf32>
    %36 = vector.shape_cast %35 : vector<32x8xf32> to vector<32x8x1xf32>
    %37 = vector.extract_strided_slice %8 {offsets = [0, 0, 0], sizes = [32, 8, 8], strides = [1, 1, 1]} : vector<32x8x16xf32> to vector<32x8x8xf32>
    %38 = vector.broadcast %36 : vector<32x8x1xf32> to vector<32x8x8xf32>
    %39 = arith.mulf %38, %37 : vector<32x8x8xf32>
    %cst_18 = arith.constant dense<0.000000e+00> : vector<32x8xf32>
    %40 = vector.multi_reduction <add>, %39, %cst_18 [1] : vector<32x8x8xf32> to vector<32x8xf32>
    %41 = vector.extract_strided_slice %10 {offsets = [0, 8], sizes = [32, 8], strides = [1, 1]} : vector<32x16xf32> to vector<32x8xf32>
    %cst_19 = arith.constant dense<0.000000e+00> : vector<32xf32>
    %42 = vector.multi_reduction <add>, %41, %cst_19 [1] : vector<32x8xf32> to vector<32xf32>
    %43 = vector.shape_cast %42 : vector<32xf32> to vector<32x1xf32>
    %44 = vector.extract_strided_slice %13 {offsets = [0, 0, 8], sizes = [32, 8, 8], strides = [1, 1, 1]} : vector<32x8x16xf32> to vector<32x8x8xf32>
    %cst_20 = arith.constant dense<0.000000e+00> : vector<32x8xf32>
    %45 = vector.multi_reduction <add>, %44, %cst_20 [2] : vector<32x8x8xf32> to vector<32x8xf32>
    %46 = vector.broadcast %43 : vector<32x1xf32> to vector<32x8xf32>
    %47 = arith.addf %46, %45 : vector<32x8xf32>
    %cst_21 = arith.constant 0.000000e+00 : f32
    %48 = vector.broadcast %cst_21 : f32 to vector<32x8xf32>
    %49 = arith.cmpf ogt, %47, %48 : vector<32x8xf32>
    %cst_22 = arith.constant 2.000000e-01 : f32
    %50 = vector.broadcast %cst_22 : f32 to vector<32x8xf32>
    %51 = arith.mulf %50, %47 : vector<32x8xf32>
    %52 = arith.select %49, %47, %51 : vector<32x8xi1>, vector<32x8xf32>
    %cst_23 = arith.constant dense<0xFF800000> : vector<32xf32>
    %53 = vector.multi_reduction <maximumf>, %52, %cst_23 [1] : vector<32x8xf32> to vector<32xf32>
    %54 = vector.shape_cast %53 : vector<32xf32> to vector<32x1xf32>
    %55 = vector.broadcast %54 : vector<32x1xf32> to vector<32x8xf32>
    %56 = arith.subf %52, %55 : vector<32x8xf32>
    %57 = math.exp %56 : vector<32x8xf32>
    %cst_24 = arith.constant dense<0.000000e+00> : vector<32xf32>
    %58 = vector.multi_reduction <add>, %57, %cst_24 [1] : vector<32x8xf32> to vector<32xf32>
    %59 = vector.shape_cast %58 : vector<32xf32> to vector<32x1xf32>
    %60 = tpu.reciprocal %59 {approx = true} : vector<32x1xf32> -> vector<32x1xf32>
    %61 = vector.broadcast %60 : vector<32x1xf32> to vector<32x8xf32>
    %62 = arith.mulf %57, %61 : vector<32x8xf32>
    %63 = vector.shape_cast %62 : vector<32x8xf32> to vector<32x8x1xf32>
    %64 = vector.extract_strided_slice %8 {offsets = [0, 0, 8], sizes = [32, 8, 8], strides = [1, 1, 1]} : vector<32x8x16xf32> to vector<32x8x8xf32>
    %65 = vector.broadcast %63 : vector<32x8x1xf32> to vector<32x8x8xf32>
    %66 = arith.mulf %65, %64 : vector<32x8x8xf32>
    %cst_25 = arith.constant dense<0.000000e+00> : vector<32x8xf32>
    %67 = vector.multi_reduction <add>, %66, %cst_25 [1] : vector<32x8x8xf32> to vector<32x8xf32>
    %68 = tpu.concatenate %40, %67 in 1 : vector<32x8xf32>, vector<32x8xf32> -> vector<32x16xf32>
    %cst_26 = arith.constant 0.000000e+00 : f32
    %69 = vector.broadcast %cst_26 : f32 to vector<32x16xf32>
    %70 = arith.cmpf ogt, %6, %69 : vector<32x16xf32>
    %71 = math.exp %6 : vector<32x16xf32>
    %cst_27 = arith.constant 1.000000e+00 : f32
    %72 = vector.broadcast %cst_27 : f32 to vector<32x16xf32>
    %73 = arith.subf %71, %72 : vector<32x16xf32>
    %74 = arith.select %70, %6, %73 : vector<32x16xi1>, vector<32x16xf32>
    %cst_28 = arith.constant 0.000000e+00 : f32
    %75 = vector.broadcast %cst_28 : f32 to vector<32x16xf32>
    %76 = arith.cmpf ogt, %68, %75 : vector<32x16xf32>
    %77 = math.exp %68 : vector<32x16xf32>
    %cst_29 = arith.constant 1.000000e+00 : f32
    %78 = vector.broadcast %cst_29 : f32 to vector<32x16xf32>
    %79 = arith.subf %77, %78 : vector<32x16xf32>
    %80 = arith.select %76, %68, %79 : vector<32x16xi1>, vector<32x16xf32>
    %81 = tpu.concatenate %74, %80 in 1 : vector<32x16xf32>, vector<32x16xf32> -> vector<32x32xf32>
    %c0_30 = arith.constant 0 : index
    %c0_31 = arith.constant 0 : index
    %82 = vector.load %arg7[%c0_30, %c0_31] : memref<32x32xf32, #tpu.memory_space<vmem>>, vector<32x32xf32>
    tpu.vector_store %arg7[%c0_30, %c0_31], %81 {strides = array<i32>} : memref<32x32xf32, #tpu.memory_space<vmem>>, vector<32x32xf32>,
    return
  }
  func.func @transform_0(%arg0: i32) -> (i32, i32) {
    %c0_i32 = arith.constant 0 : i32
    %c0_i32_0 = arith.constant 0 : i32
    return %arg0, %c0_i32 : i32, i32
  }
  func.func @transform_1(%arg0: i32) -> (i32, i32) {
    %c0_i32 = arith.constant 0 : i32
    %c0_i32_0 = arith.constant 0 : i32
    return %arg0, %c0_i32 : i32, i32
  }
  func.func @transform_2(%arg0: i32) -> (i32, i32) {
    %c0_i32 = arith.constant 0 : i32
    %c0_i32_0 = arith.constant 0 : i32
    %c0_i32_1 = arith.constant 0 : i32
    return %c0_i32, %c0_i32_0 : i32, i32
  }
  func.func @transform_3(%arg0: i32) -> (i32, i32) {
    %c0_i32 = arith.constant 0 : i32
    %c0_i32_0 = arith.constant 0 : i32
    %c0_i32_1 = arith.constant 0 : i32
    return %c0_i32, %c0_i32_0 : i32, i32
  }
  func.func @transform_4(%arg0: i32) -> (i32, i32) {
    %c0_i32 = arith.constant 0 : i32
    %c0_i32_0 = arith.constant 0 : i32
    %c0_i32_1 = arith.constant 0 : i32
    return %c0_i32, %c0_i32_0 : i32, i32
  }
  func.func @transform_5(%arg0: i32) -> (i32, i32) {
    %c0_i32 = arith.constant 0 : i32
    %c0_i32_0 = arith.constant 0 : i32
    %c0_i32_1 = arith.constant 0 : i32
    return %c0_i32, %c0_i32_0 : i32, i32
  }
  func.func @transform_6(%arg0: i32) -> (i32, i32) {
    %c0_i32 = arith.constant 0 : i32
    %c0_i32_0 = arith.constant 0 : i32
    return %arg0, %c0_i32 : i32, i32
  }
}

</mosaic_0001>

<llo_original>
// kernel: tpu_custom_call.1
$region0: #{tpu_custom_call.1}
  #allocation0 [shape = 'u32[]', space=smem, size = 0x4, offset = 0x4, fixed_abs, tag = 'smem constant byte address 0x4 - core index']
  #allocation1 [shape = 'u32[144,128]{1,0:T(1,128)}', space=vmem, size = 0x12000, scoped, tag = 'internal scratch']
  %s0 = inlined_call_operand.vmem [shape: f32[32,16], index: 0, kind: input, shape index: {}]
  %s1 = inlined_call_operand.vmem [shape: f32[256,24], index: 1, kind: input, shape index: {}]
  %s2 = inlined_call_operand.vmem [shape: f32[16,16], index: 2, kind: input, shape index: {}]
  %s3 = inlined_call_operand.vmem [shape: f32[24,16], index: 3, kind: input, shape index: {}]
  %s4 = inlined_call_operand.vmem [shape: f32[1,16], index: 4, kind: input, shape index: {}]
  %s5 = inlined_call_operand.vmem [shape: f32[1,16], index: 5, kind: input, shape index: {}]
  %s6 = inlined_call_operand.hbm [shape: f32[32,32], index: 6, kind: output, shape index: {}]
  %s7 = sld [smem:[#allocation0]]
  $region34: #{tpu_custom_call.1} parent=0
    _
  %s9 = ssub.s32 1, %s7
  %s10 = scalar_select 0, %s9, %s7
  $region1: #{tpu_custom_call.1} parent=0
    #allocation2 [shape = 'u8[16384]{0}', space=vmem, size = 0x4000, scoped, tag = 'output window, operand 0, single buffered']
    #allocation3 [shape = 's32[1]{0}', space=sflag, size = 0x4, scoped, tag = 'scoped memory for tpu_custom_call.1']
    %11 = vsyncpa [#allocation3], 0
    // Predicated region
    $region2: #{tpu_custom_call.1} parent=1 // pred_check
      _
    $region3: #{tpu_custom_call.1} parent=1 // pred_check_branch
      %13 = sbr.rel (0) target = $region5
    $region4: #{tpu_custom_call.1} parent=1 // pred_region
      _
    $region5: #{tpu_custom_call.1} parent=1 // pred_fallthru
      _
    // Predicated region
    $region6: #{tpu_custom_call.1} parent=1 // pred_check
      _
    $region7: #{tpu_custom_call.1} parent=1 // pred_check_branch
      %15 = sbr.rel (0) target = $region9
    $region8: #{tpu_custom_call.1} parent=1 // pred_region
      _
    $region9: #{tpu_custom_call.1} parent=1 // pred_fallthru
      _
    // Predicated region
    $region10: #{tpu_custom_call.1} parent=1 // pred_check
      _
    $region11: #{tpu_custom_call.1} parent=1 // pred_check_branch
      %17 = sbr.rel (0) target = $region13
    $region12: #{tpu_custom_call.1} parent=1 // pred_region
      _
    $region13: #{tpu_custom_call.1} parent=1 // pred_fallthru
      _
    // Predicated region
    $region14: #{tpu_custom_call.1} parent=1 // pred_check
      _
    $region15: #{tpu_custom_call.1} parent=1 // pred_check_branch
      %19 = sbr.rel (0) target = $region17
    $region16: #{tpu_custom_call.1} parent=1 // pred_region
      _
    $region17: #{tpu_custom_call.1} parent=1 // pred_fallthru
      _
    // Predicated region
    $region18: #{tpu_custom_call.1} parent=1 // pred_check
      _
    $region19: #{tpu_custom_call.1} parent=1 // pred_check_branch
      %21 = sbr.rel (0) target = $region21
    $region20: #{tpu_custom_call.1} parent=1 // pred_region
      _
    $region21: #{tpu_custom_call.1} parent=1 // pred_fallthru
      _
    // Predicated region
    $region22: #{tpu_custom_call.1} parent=1 // pred_check
      _
    $region23: #{tpu_custom_call.1} parent=1 // pred_check_branch
      %23 = sbr.rel (0) target = $region25
    $region24: #{tpu_custom_call.1} parent=1 // pred_region
      _
    $region25: #{tpu_custom_call.1} parent=1 // pred_fallthru
      _
    %v24 = vld [vmem:[%s0] sm:$0xff]
    %v25 = vld [vmem:[%s0 + $0x8] sm:$0xff]
    %v26 = vld [vmem:[%s0 + $0x10] sm:$0xff]
    %v27 = vld [vmem:[%s0 + $0x18] sm:$0xff]
    %v28 = vld [vmem:[%s1] sm:$0xff]
    %v29 = vld [vmem:[%s1 + $0x8] sm:$0xff]
    %v30 = vld [vmem:[%s1 + $0x10] sm:$0xff]
    %v31 = vld [vmem:[%s1 + $0x18] sm:$0xff]
    %v32 = vld [vmem:[%s1 + $0x20] sm:$0xff]
    %v33 = vld [vmem:[%s1 + $0x28] sm:$0xff]
    %v34 = vld [vmem:[%s1 + $0x30] sm:$0xff]
    %v35 = vld [vmem:[%s1 + $0x38] sm:$0xff]
    %v36 = vld [vmem:[%s1 + $0x40] sm:$0xff]
    %v37 = vld [vmem:[%s1 + $0x48] sm:$0xff]
    %v38 = vld [vmem:[%s1 + $0x50] sm:$0xff]
    %v39 = vld [vmem:[%s1 + $0x58] sm:$0xff]
    %v40 = vld [vmem:[%s1 + $0x60] sm:$0xff]
    %v41 = vld [vmem:[%s1 + $0x68] sm:$0xff]
    %v42 = vld [vmem:[%s1 + $0x70] sm:$0xff]
    %v43 = vld [vmem:[%s1 + $0x78] sm:$0xff]
    %v44 = vld [vmem:[%s1 + $0x80] sm:$0xff]
    %v45 = vld [vmem:[%s1 + $0x88] sm:$0xff]
    %v46 = vld [vmem:[%s1 + $0x90] sm:$0xff]
    %v47 = vld [vmem:[%s1 + $0x98] sm:$0xff]
    %v48 = vld [vmem:[%s1 + $0xa0] sm:$0xff]
    %v49 = vld [vmem:[%s1 + $0xa8] sm:$0xff]
    %v50 = vld [vmem:[%s1 + $0xb0] sm:$0xff]
    %v51 = vld [vmem:[%s1 + $0xb8] sm:$0xff]
    %v52 = vld [vmem:[%s1 + $0xc0] sm:$0xff]
    %v53 = vld [vmem:[%s1 + $0xc8] sm:$0xff]
    %v54 = vld [vmem:[%s1 + $0xd0] sm:$0xff]
    %v55 = vld [vmem:[%s1 + $0xd8] sm:$0xff]
    %v56 = vld [vmem:[%s1 + $0xe0] sm:$0xff]
    %v57 = vld [vmem:[%s1 + $0xe8] sm:$0xff]
    %v58 = vld [vmem:[%s1 + $0xf0] sm:$0xff]
    %v59 = vld [vmem:[%s1 + $0xf8] sm:$0xff]
    %v60 = vld [vmem:[%s2] sm:$0xff]
    %v61 = vld [vmem:[%s2 + $0x8] sm:$0xff]
    %v62 = vld [vmem:[%s3] sm:$0xff]
    %v63 = vld [vmem:[%s3 + $0x8] sm:$0xff]
    %v64 = vld [vmem:[%s3 + $0x10] sm:$0xff]
    %v65 = vld [vmem:[%s4] sm:$0x1]
    %v66 = vld [vmem:[%s5] sm:$0x1]
    %vm67 = vcmask 130048
    %v69 = vsel %vm67, %v24, 0
    %v72 = vsel %vm67, %v25, 0
    %v75 = vsel %vm67, %v26, 0
    %v78 = vsel %vm67, %v27, 0
    %80 = vmatprep.subr.mxu0 0.0
    %81 = vmatpush1.msra.mxu0 %v60
    %82 = vmatprep.subr.mxu0 0.0
    %83 = vmatpush1.msra.mxu0 %v61
    %84 = vmatprep.subr.mxu0 0.0
    %85 = vmatpush1.msra.mxu0 0.0
    %86 = vmatprep.subr.mxu0 0.0
    %87 = vmatpush1.msra.mxu0 0.0
    %88 = vmatprep.subr.mxu0 0.0
    %89 = vmatpush1.msra.mxu0 0.0
    %90 = vmatprep.subr.mxu0 0.0
    %91 = vmatpush1.msra.mxu0 0.0
    %92 = vmatprep.subr.mxu0 0.0
    %93 = vmatpush1.msra.mxu0 0.0
    %94 = vmatprep.subr.mxu0 0.0
    %95 = vmatpush1.msra.mxu0 0.0
    %96 = vmatprep.subr.mxu0 0.0
    %97 = vmatpush1.msra.mxu0 0.0
    %98 = vmatprep.subr.mxu0 0.0
    %99 = vmatpush1.msra.mxu0 0.0
    %100 = vmatprep.subr.mxu0 0.0
    %101 = vmatpush1.msra.mxu0 0.0
    %102 = vmatprep.subr.mxu0 0.0
    %103 = vmatpush1.msra.mxu0 0.0
    %104 = vmatprep.subr.mxu0 0.0
    %105 = vmatpush1.msra.mxu0 0.0
    %106 = vmatprep.subr.mxu0 0.0
    %107 = vmatpush1.msra.mxu0 0.0
    %108 = vmatprep.subr.mxu0 0.0
    %109 = vmatpush1.msra.mxu0 0.0
    %110 = vmatprep.subr.mxu0 0.0
    %111 = vmatpush1.msra.mxu0 0.0
    %112 = vmatprep.subr.mxu0 0.0
    %113 = vmatpush1.msra.mxu0 0.0
    %114 = vmatprep.subr.mxu0 0.0
    %115 = vmatpush1.msra.mxu0 0.0
    %116 = vmatprep.subr.mxu0 0.0
    %117 = vmatpush1.msra.mxu0 0.0
    %118 = vmatprep.subr.mxu0 0.0
    %119 = vmatpush1.msra.mxu0 0.0
    %120 = vmatprep.subr.mxu0 0.0
    %121 = vmatpush1.msra.mxu0 0.0
    %122 = vmatprep.subr.mxu0 0.0
    %123 = vmatpush1.msra.mxu0 0.0
    %124 = vmatprep.subr.mxu0 0.0
    %125 = vmatpush1.msra.mxu0 0.0
    %126 = vmatprep.subr.mxu0 0.0
    %127 = vmatpush1.msra.mxu0 0.0
    %128 = vmatprep.subr.mxu0 0.0
    %129 = vmatpush1.msra.mxu0 0.0
    %130 = vmatprep.subr.mxu0 0.0
    %131 = vmatpush1.msra.mxu0 0.0
    %132 = vmatprep.subr.mxu0 0.0
    %133 = vmatpush1.msra.mxu0 0.0
    %134 = vmatprep.subr.mxu0 0.0
    %135 = vmatpush1.msra.mxu0 0.0
    %136 = vmatprep.subr.mxu0 0.0
    %137 = vmatpush1.msra.mxu0 0.0
    %138 = vmatprep.subr.mxu0 0.0
    %139 = vmatpush1.msra.mxu0 0.0
    %140 = vmatprep.subr.mxu0 0.0
    %141 = vmatpush1.msra.mxu0 0.0
    %142 = vmatprep.subr.mxu0 0.0
    %143 = vmatpush1.msra.mxu0 0.0
    %144 = vmatprep.mubr.f32.mxu0 0.0
    %145 = vmatmul.mubr.f32.gmra.mrb[0].mxu0 %v69
    %v146 = vpop.f32.mrb[0].mxu0
    %v147 = vadd.f32 0.0, %v146
    %v148 = vpop.f32.mrb[0].mxu0
    %149 = vmatprep.mubr.f32.mxu0 0.0
    %150 = vmatmul.mubr.f32.gmra.mrb[0].mxu0 %v72
    %v151 = vpop.f32.mrb[0].mxu0
    %v152 = vadd.f32 0.0, %v151
    %v153 = vpop.f32.mrb[0].mxu0
    %154 = vmatprep.mubr.f32.mxu0 0.0
    %155 = vmatmul.mubr.f32.gmra.mrb[0].mxu0 %v75
    %v156 = vpop.f32.mrb[0].mxu0
    %v157 = vadd.f32 0.0, %v156
    %v158 = vpop.f32.mrb[0].mxu0
    %159 = vmatprep.mubr.f32.mxu0 0.0
    %160 = vmatmul.mubr.f32.gmra.mrb[0].mxu0 %v78
    %v161 = vpop.f32.mrb[0].mxu0
    %v162 = vadd.f32 0.0, %v161
    %v163 = vpop.f32.mrb[0].mxu0
    %164 = vdwg.mxu0
    %vm165 = vcmask 195584
    %v167 = vsel %vm165, %v28, 0
    %v170 = vsel %vm165, %v29, 0
    %v173 = vsel %vm165, %v30, 0
    %v176 = vsel %vm165, %v31, 0
    %v179 = vsel %vm165, %v32, 0
    %v182 = vsel %vm165, %v33, 0
    %v185 = vsel %vm165, %v34, 0
    %v188 = vsel %vm165, %v35, 0
    %v191 = vsel %vm165, %v36, 0
    %v194 = vsel %vm165, %v37, 0
    %v197 = vsel %vm165, %v38, 0
    %v200 = vsel %vm165, %v39, 0
    %v203 = vsel %vm165, %v40, 0
    %v206 = vsel %vm165, %v41, 0
    %v209 = vsel %vm165, %v42, 0
    %v212 = vsel %vm165, %v43, 0
    %v215 = vsel %vm165, %v44, 0
    %v218 = vsel %vm165, %v45, 0
    %v221 = vsel %vm165, %v46, 0
    %v224 = vsel %vm165, %v47, 0
    %v227 = vsel %vm165, %v48, 0
    %v230 = vsel %vm165, %v49, 0
    %v233 = vsel %vm165, %v50, 0
    %v236 = vsel %vm165, %v51, 0
    %v239 = vsel %vm165, %v52, 0
    %v242 = vsel %vm165, %v53, 0
    %v245 = vsel %vm165, %v54, 0
    %v248 = vsel %vm165, %v55, 0
    %v251 = vsel %vm165, %v56, 0
    %v254 = vsel %vm165, %v57, 0
    %v257 = vsel %vm165, %v58, 0
    %v260 = vsel %vm165, %v59, 0
    %262 = vmatprep.subr.mxu0 0.0
    %263 = vmatpush1.msra.mxu0 %v62
    %264 = vmatprep.subr.mxu0 0.0
    %265 = vmatpush1.msra.mxu0 %v63
    %266 = vmatprep.subr.mxu0 0.0
    %267 = vmatpush1.msra.mxu0 %v64
    %268 = vmatprep.subr.mxu0 0.0
    %269 = vmatpush1.msra.mxu0 0.0
    %270 = vmatprep.subr.mxu0 0.0
    %271 = vmatpush1.msra.mxu0 0.0
    %272 = vmatprep.subr.mxu0 0.0
    %273 = vmatpush1.msra.mxu0 0.0
    %274 = vmatprep.subr.mxu0 0.0
    %275 = vmatpush1.msra.mxu0 0.0
    %276 = vmatprep.subr.mxu0 0.0
    %277 = vmatpush1.msra.mxu0 0.0
    %278 = vmatprep.subr.mxu0 0.0
    %279 = vmatpush1.msra.mxu0 0.0
    %280 = vmatprep.subr.mxu0 0.0
    %281 = vmatpush1.msra.mxu0 0.0
    %282 = vmatprep.subr.mxu0 0.0
    %283 = vmatpush1.msra.mxu0 0.0
    %284 = vmatprep.subr.mxu0 0.0
    %285 = vmatpush1.msra.mxu0 0.0
    %286 = vmatprep.subr.mxu0 0.0
    %287 = vmatpush1.msra.mxu0 0.0
    %288 = vmatprep.subr.mxu0 0.0
    %289 = vmatpush1.msra.mxu0 0.0
    %290 = vmatprep.subr.mxu0 0.0
    %291 = vmatpush1.msra.mxu0 0.0
    %292 = vmatprep.subr.mxu0 0.0
    %293 = vmatpush1.msra.mxu0 0.0
    %294 = vmatprep.subr.mxu0 0.0
    %295 = vmatpush1.msra.mxu0 0.0
    %296 = vmatprep.subr.mxu0 0.0
    %297 = vmatpush1.msra.mxu0 0.0
    %298 = vmatprep.subr.mxu0 0.0
    %299 = vmatpush1.msra.mxu0 0.0
    %300 = vmatprep.subr.mxu0 0.0
    %301 = vmatpush1.msra.mxu0 0.0
    %302 = vmatprep.subr.mxu0 0.0
    %303 = vmatpush1.msra.mxu0 0.0
    %304 = vmatprep.subr.mxu0 0.0
    %305 = vmatpush1.msra.mxu0 0.0
    %306 = vmatprep.subr.mxu0 0.0
    %307 = vmatpush1.msra.mxu0 0.0
    %308 = vmatprep.subr.mxu0 0.0
    %309 = vmatpush1.msra.mxu0 0.0
    %310 = vmatprep.subr.mxu0 0.0
    %311 = vmatpush1.msra.mxu0 0.0
    %312 = vmatprep.subr.mxu0 0.0
    %313 = vmatpush1.msra.mxu0 0.0
    %314 = vmatprep.subr.mxu0 0.0
    %315 = vmatpush1.msra.mxu0 0.0
    %316 = vmatprep.subr.mxu0 0.0
    %317 = vmatpush1.msra.mxu0 0.0
    %318 = vmatprep.subr.mxu0 0.0
    %319 = vmatpush1.msra.mxu0 0.0
    %320 = vmatprep.subr.mxu0 0.0
    %321 = vmatpush1.msra.mxu0 0.0
    %322 = vmatprep.subr.mxu0 0.0
    %323 = vmatpush1.msra.mxu0 0.0
    %324 = vmatprep.subr.mxu0 0.0
    %325 = vmatpush1.msra.mxu0 0.0
    %326 = vmatprep.mubr.f32.mxu0 0.0
    %327 = vmatmul.mubr.f32.gmra.mrb[0].mxu0 %v167
    %v328 = vpop.f32.mrb[0].mxu0
    %v329 = vadd.f32 0.0, %v328
    %v330 = vpop.f32.mrb[0].mxu0
    %331 = vmatprep.mubr.f32.mxu0 0.0
    %332 = vmatmul.mubr.f32.gmra.mrb[0].mxu0 %v170
    %v333 = vpop.f32.mrb[0].mxu0
    %v334 = vadd.f32 0.0, %v333
    %v335 = vpop.f32.mrb[0].mxu0
    %336 = vmatprep.mubr.f32.mxu0 0.0
    %337 = vmatmul.mubr.f32.gmra.mrb[0].mxu0 %v173
    %v338 = vpop.f32.mrb[0].mxu0
    %v339 = vadd.f32 0.0, %v338
    %v340 = vpop.f32.mrb[0].mxu0
    %341 = vmatprep.mubr.f32.mxu0 0.0
    %342 = vmatmul.mubr.f32.gmra.mrb[0].mxu0 %v176
    %v343 = vpop.f32.mrb[0].mxu0
    %v344 = vadd.f32 0.0, %v343
    %v345 = vpop.f32.mrb[0].mxu0
    %346 = vmatprep.mubr.f32.mxu0 0.0
    %347 = vmatmul.mubr.f32.gmra.mrb[0].mxu0 %v179
    %v348 = vpop.f32.mrb[0].mxu0
    %v349 = vadd.f32 0.0, %v348
    %v350 = vpop.f32.mrb[0].mxu0
    %351 = vmatprep.mubr.f32.mxu0 0.0
    %352 = vmatmul.mubr.f32.gmra.mrb[0].mxu0 %v182
    %v353 = vpop.f32.mrb[0].mxu0
    %v354 = vadd.f32 0.0, %v353
    %v355 = vpop.f32.mrb[0].mxu0
    %356 = vmatprep.mubr.f32.mxu0 0.0
    %357 = vmatmul.mubr.f32.gmra.mrb[0].mxu0 %v185
    %v358 = vpop.f32.mrb[0].mxu0
    %v359 = vadd.f32 0.0, %v358
    %v360 = vpop.f32.mrb[0].mxu0
    %361 = vmatprep.mubr.f32.mxu0 0.0
    %362 = vmatmul.mubr.f32.gmra.mrb[0].mxu0 %v188
    %v363 = vpop.f32.mrb[0].mxu0
    %v364 = vadd.f32 0.0, %v363
    %v365 = vpop.f32.mrb[0].mxu0
    %366 = vmatprep.mubr.f32.mxu0 0.0
    %367 = vmatmul.mubr.f32.gmra.mrb[0].mxu0 %v191
    %v368 = vpop.f32.mrb[0].mxu0
    %v369 = vadd.f32 0.0, %v368
    %v370 = vpop.f32.mrb[0].mxu0
    %371 = vmatprep.mubr.f32.mxu0 0.0
    %372 = vmatmul.mubr.f32.gmra.mrb[0].mxu0 %v194
    %v373 = vpop.f32.mrb[0].mxu0
    %v374 = vadd.f32 0.0, %v373
    %v375 = vpop.f32.mrb[0].mxu0
    %376 = vmatprep.mubr.f32.mxu0 0.0
    %377 = vmatmul.mubr.f32.gmra.mrb[0].mxu0 %v197
    %v378 = vpop.f32.mrb[0].mxu0
    %v379 = vadd.f32 0.0, %v378
    %v380 = vpop.f32.mrb[0].mxu0
    %381 = vmatprep.mubr.f32.mxu0 0.0
    %382 = vmatmul.mubr.f32.gmra.mrb[0].mxu0 %v200
    %v383 = vpop.f32.mrb[0].mxu0
    %v384 = vadd.f32 0.0, %v383
    %v385 = vpop.f32.mrb[0].mxu0
    %386 = vmatprep.mubr.f32.mxu0 0.0
    %387 = vmatmul.mubr.f32.gmra.mrb[0].mxu0 %v203
    %v388 = vpop.f32.mrb[0].mxu0
    %v389 = vadd.f32 0.0, %v388
    %v390 = vpop.f32.mrb[0].mxu0
    %391 = vmatprep.mubr.f32.mxu0 0.0
    %392 = vmatmul.mubr.f32.gmra.mrb[0].mxu0 %v206
    %v393 = vpop.f32.mrb[0].mxu0
    %v394 = vadd.f32 0.0, %v393
    %v395 = vpop.f32.mrb[0].mxu0
    %396 = vmatprep.mubr.f32.mxu0 0.0
    %397 = vmatmul.mubr.f32.gmra.mrb[0].mxu0 %v209
    %v398 = vpop.f32.mrb[0].mxu0
    %v399 = vadd.f32 0.0, %v398
    %v400 = vpop.f32.mrb[0].mxu0
    %401 = vmatprep.mubr.f32.mxu0 0.0
    %402 = vmatmul.mubr.f32.gmra.mrb[0].mxu0 %v212
    %v403 = vpop.f32.mrb[0].mxu0
    %v404 = vadd.f32 0.0, %v403
    %v405 = vpop.f32.mrb[0].mxu0
    %406 = vmatprep.mubr.f32.mxu0 0.0
    %407 = vmatmul.mubr.f32.gmra.mrb[0].mxu0 %v215
    %v408 = vpop.f32.mrb[0].mxu0
    %v409 = vadd.f32 0.0, %v408
    %v410 = vpop.f32.mrb[0].mxu0
    %411 = vmatprep.mubr.f32.mxu0 0.0
    %412 = vmatmul.mubr.f32.gmra.mrb[0].mxu0 %v218
    %v413 = vpop.f32.mrb[0].mxu0
    %v414 = vadd.f32 0.0, %v413
    %v415 = vpop.f32.mrb[0].mxu0
    %416 = vmatprep.mubr.f32.mxu0 0.0
    %417 = vmatmul.mubr.f32.gmra.mrb[0].mxu0 %v221
    %v418 = vpop.f32.mrb[0].mxu0
    %v419 = vadd.f32 0.0, %v418
    %v420 = vpop.f32.mrb[0].mxu0
    %421 = vmatprep.mubr.f32.mxu0 0.0
    %422 = vmatmul.mubr.f32.gmra.mrb[0].mxu0 %v224
    %v423 = vpop.f32.mrb[0].mxu0
    %v424 = vadd.f32 0.0, %v423
    %v425 = vpop.f32.mrb[0].mxu0
    %426 = vmatprep.mubr.f32.mxu0 0.0
    %427 = vmatmul.mubr.f32.gmra.mrb[0].mxu0 %v227
    %v428 = vpop.f32.mrb[0].mxu0
    %v429 = vadd.f32 0.0, %v428
    %v430 = vpop.f32.mrb[0].mxu0
    %431 = vmatprep.mubr.f32.mxu0 0.0
    %432 = vmatmul.mubr.f32.gmra.mrb[0].mxu0 %v230
    %v433 = vpop.f32.mrb[0].mxu0
    %v434 = vadd.f32 0.0, %v433
    %v435 = vpop.f32.mrb[0].mxu0
    %436 = vmatprep.mubr.f32.mxu0 0.0
    %437 = vmatmul.mubr.f32.gmra.mrb[0].mxu0 %v233
    %v438 = vpop.f32.mrb[0].mxu0
    %v439 = vadd.f32 0.0, %v438
    %v440 = vpop.f32.mrb[0].mxu0
    %441 = vmatprep.mubr.f32.mxu0 0.0
    %442 = vmatmul.mubr.f32.gmra.mrb[0].mxu0 %v236
    %v443 = vpop.f32.mrb[0].mxu0
    %v444 = vadd.f32 0.0, %v443
    %v445 = vpop.f32.mrb[0].mxu0
    %446 = vmatprep.mubr.f32.mxu0 0.0
    %447 = vmatmul.mubr.f32.gmra.mrb[0].mxu0 %v239
    %v448 = vpop.f32.mrb[0].mxu0
    %v449 = vadd.f32 0.0, %v448
    %v450 = vpop.f32.mrb[0].mxu0
    %451 = vmatprep.mubr.f32.mxu0 0.0
    %452 = vmatmul.mubr.f32.gmra.mrb[0].mxu0 %v242
    %v453 = vpop.f32.mrb[0].mxu0
    %v454 = vadd.f32 0.0, %v453
    %v455 = vpop.f32.mrb[0].mxu0
    %456 = vmatprep.mubr.f32.mxu0 0.0
    %457 = vmatmul.mubr.f32.gmra.mrb[0].mxu0 %v245
    %v458 = vpop.f32.mrb[0].mxu0
    %v459 = vadd.f32 0.0, %v458
    %v460 = vpop.f32.mrb[0].mxu0
    %461 = vmatprep.mubr.f32.mxu0 0.0
    %462 = vmatmul.mubr.f32.gmra.mrb[0].mxu0 %v248
    %v463 = vpop.f32.mrb[0].mxu0
    %v464 = vadd.f32 0.0, %v463
    %v465 = vpop.f32.mrb[0].mxu0
    %466 = vmatprep.mubr.f32.mxu0 0.0
    %467 = vmatmul.mubr.f32.gmra.mrb[0].mxu0 %v251
    %v468 = vpop.f32.mrb[0].mxu0
    %v469 = vadd.f32 0.0, %v468
    %v470 = vpop.f32.mrb[0].mxu0
    %471 = vmatprep.mubr.f32.mxu0 0.0
    %472 = vmatmul.mubr.f32.gmra.mrb[0].mxu0 %v254
    %v473 = vpop.f32.mrb[0].mxu0
    %v474 = vadd.f32 0.0, %v473
    %v475 = vpop.f32.mrb[0].mxu0
    %476 = vmatprep.mubr.f32.mxu0 0.0
    %477 = vmatmul.mubr.f32.gmra.mrb[0].mxu0 %v257
    %v478 = vpop.f32.mrb[0].mxu0
    %v479 = vadd.f32 0.0, %v478
    %v480 = vpop.f32.mrb[0].mxu0
    %481 = vmatprep.mubr.f32.mxu0 0.0
    %482 = vmatmul.mubr.f32.gmra.mrb[0].mxu0 %v260
    %v483 = vpop.f32.mrb[0].mxu0
    %v484 = vadd.f32 0.0, %v483
    %v485 = vpop.f32.mrb[0].mxu0
    %486 = vdwg.mxu0
    %v488 = vlaneseq
    %v489 = vshrl.u32 %v488, 7
    %v490 = vsub.s32 0, %v489
    %v491 = vrot.slane %v65, %v490
    %v493 = vmul.f32 %v147, %v491
    %v494 = vmul.f32 %v152, %v491
    %v495 = vmul.f32 %v157, %v491
    %v496 = vmul.f32 %v162, %v491
    %v498 = vlaneseq
    %v499 = vshrl.u32 %v498, 7
    %v500 = vsub.s32 0, %v499
    %v501 = vrot.slane %v66, %v500
    %v503 = vmul.f32 %v329, %v501
    %v504 = vmul.f32 %v334, %v501
    %v505 = vmul.f32 %v339, %v501
    %v506 = vmul.f32 %v344, %v501
    %v507 = vmul.f32 %v349, %v501
    %v508 = vmul.f32 %v354, %v501
    %v509 = vmul.f32 %v359, %v501
    %v510 = vmul.f32 %v364, %v501
    %v511 = vmul.f32 %v369, %v501
    %v512 = vmul.f32 %v374, %v501
    %v513 = vmul.f32 %v379, %v501
    %v514 = vmul.f32 %v384, %v501
    %v515 = vmul.f32 %v389, %v501
    %v516 = vmul.f32 %v394, %v501
    %v517 = vmul.f32 %v399, %v501
    %v518 = vmul.f32 %v404, %v501
    %v519 = vmul.f32 %v409, %v501
    %v520 = vmul.f32 %v414, %v501
    %v521 = vmul.f32 %v419, %v501
    %v522 = vmul.f32 %v424, %v501
    %v523 = vmul.f32 %v429, %v501
    %v524 = vmul.f32 %v434, %v501
    %v525 = vmul.f32 %v439, %v501
    %v526 = vmul.f32 %v444, %v501
    %v527 = vmul.f32 %v449, %v501
    %v528 = vmul.f32 %v454, %v501
    %v529 = vmul.f32 %v459, %v501
    %v530 = vmul.f32 %v464, %v501
    %v531 = vmul.f32 %v469, %v501
    %v532 = vmul.f32 %v474, %v501
    %v533 = vmul.f32 %v479, %v501
    %v534 = vmul.f32 %v484, %v501
    %vm535 = vcmask 64512
    %v536 = vsel %vm535, %v493, 0.0
    %537 = vadd.xlane.f32.xlu0 %v536
    %v538 = vpop.xlane.xlu0 %537
    %v539 = vsel %vm535, %v494, 0.0
    %540 = vadd.xlane.f32.xlu0 %v539
    %v541 = vpop.xlane.xlu0 %540
    %v542 = vsel %vm535, %v495, 0.0
    %543 = vadd.xlane.f32.xlu0 %v542
    %v544 = vpop.xlane.xlu0 %543
    %v545 = vsel %vm535, %v496, 0.0
    %546 = vadd.xlane.f32.xlu0 %v545
    %v547 = vpop.xlane.xlu0 %546
    %v548 = vsel %vm535, %v503, 0.0
    %549 = vadd.xlane.f32.xlu0 %v548
    %v550 = vpop.xlane.xlu0 %549
    %v551 = vsel %vm535, %v504, 0.0
    %552 = vadd.xlane.f32.xlu0 %v551
    %v553 = vpop.xlane.xlu0 %552
    %v554 = vsel %vm535, %v505, 0.0
    %555 = vadd.xlane.f32.xlu0 %v554
    %v556 = vpop.xlane.xlu0 %555
    %v557 = vsel %vm535, %v506, 0.0
    %558 = vadd.xlane.f32.xlu0 %v557
    %v559 = vpop.xlane.xlu0 %558
    %v560 = vsel %vm535, %v507, 0.0
    %561 = vadd.xlane.f32.xlu0 %v560
    %v562 = vpop.xlane.xlu0 %561
    %v563 = vsel %vm535, %v508, 0.0
    %564 = vadd.xlane.f32.xlu0 %v563
    %v565 = vpop.xlane.xlu0 %564
    %v566 = vsel %vm535, %v509, 0.0
    %567 = vadd.xlane.f32.xlu0 %v566
    %v568 = vpop.xlane.xlu0 %567
    %v569 = vsel %vm535, %v510, 0.0
    %570 = vadd.xlane.f32.xlu0 %v569
    %v571 = vpop.xlane.xlu0 %570
    %v572 = vsel %vm535, %v511, 0.0
    %573 = vadd.xlane.f32.xlu0 %v572
    %v574 = vpop.xlane.xlu0 %573
    %v575 = vsel %vm535, %v512, 0.0
    %576 = vadd.xlane.f32.xlu0 %v575
    %v577 = vpop.xlane.xlu0 %576
    %v578 = vsel %vm535, %v513, 0.0
    %579 = vadd.xlane.f32.xlu0 %v578
    %v580 = vpop.xlane.xlu0 %579
    %v581 = vsel %vm535, %v514, 0.0
    %582 = vadd.xlane.f32.xlu0 %v581
    %v583 = vpop.xlane.xlu0 %582
    %v584 = vsel %vm535, %v515, 0.0
    %585 = vadd.xlane.f32.xlu0 %v584
    %v586 = vpop.xlane.xlu0 %585
    %v587 = vsel %vm535, %v516, 0.0
    %588 = vadd.xlane.f32.xlu0 %v587
    %v589 = vpop.xlane.xlu0 %588
    %v590 = vsel %vm535, %v517, 0.0
    %591 = vadd.xlane.f32.xlu0 %v590
    %v592 = vpop.xlane.xlu0 %591
    %v593 = vsel %vm535, %v518, 0.0
    %594 = vadd.xlane.f32.xlu0 %v593
    %v595 = vpop.xlane.xlu0 %594
    %v596 = vsel %vm535, %v519, 0.0
    %597 = vadd.xlane.f32.xlu0 %v596
    %v598 = vpop.xlane.xlu0 %597
    %v599 = vsel %vm535, %v520, 0.0
    %600 = vadd.xlane.f32.xlu0 %v599
    %v601 = vpop.xlane.xlu0 %600
    %v602 = vsel %vm535, %v521, 0.0
    %603 = vadd.xlane.f32.xlu0 %v602
    %v604 = vpop.xlane.xlu0 %603
    %v605 = vsel %vm535, %v522, 0.0
    %606 = vadd.xlane.f32.xlu0 %v605
    %v607 = vpop.xlane.xlu0 %606
    %v608 = vsel %vm535, %v523, 0.0
    %609 = vadd.xlane.f32.xlu0 %v608
    %v610 = vpop.xlane.xlu0 %609
    %v611 = vsel %vm535, %v524, 0.0
    %612 = vadd.xlane.f32.xlu0 %v611
    %v613 = vpop.xlane.xlu0 %612
    %v614 = vsel %vm535, %v525, 0.0
    %615 = vadd.xlane.f32.xlu0 %v614
    %v616 = vpop.xlane.xlu0 %615
    %v617 = vsel %vm535, %v526, 0.0
    %618 = vadd.xlane.f32.xlu0 %v617
    %v619 = vpop.xlane.xlu0 %618
    %v620 = vsel %vm535, %v527, 0.0
    %621 = vadd.xlane.f32.xlu0 %v620
    %v622 = vpop.xlane.xlu0 %621
    %v623 = vsel %vm535, %v528, 0.0
    %624 = vadd.xlane.f32.xlu0 %v623
    %v625 = vpop.xlane.xlu0 %624
    %v626 = vsel %vm535, %v529, 0.0
    %627 = vadd.xlane.f32.xlu0 %v626
    %v628 = vpop.xlane.xlu0 %627
    %v629 = vsel %vm535, %v530, 0.0
    %630 = vadd.xlane.f32.xlu0 %v629
    %v631 = vpop.xlane.xlu0 %630
    %v632 = vsel %vm535, %v531, 0.0
    %633 = vadd.xlane.f32.xlu0 %v632
    %v634 = vpop.xlane.xlu0 %633
    %v635 = vsel %vm535, %v532, 0.0
    %636 = vadd.xlane.f32.xlu0 %v635
    %v637 = vpop.xlane.xlu0 %636
    %v638 = vsel %vm535, %v533, 0.0
    %639 = vadd.xlane.f32.xlu0 %v638
    %v640 = vpop.xlane.xlu0 %639
    %v641 = vsel %vm535, %v534, 0.0
    %642 = vadd.xlane.f32.xlu0 %v641
    %v643 = vpop.xlane.xlu0 %642
    %v676 = vlaneseq
    %v677 = vand.u32 %v676, 127
    %v678 = vlaneseq
    %v679 = vshrl.u32 %v678, 7
    %v680 = vsub.s32 %v677, %v679
    %v681 = vrot.slane %v550, %v680
    %v682 = vlaneseq
    %v683 = vshrl.u32 %v682, 7
    %v684 = vsub.s32 %v677, %v683
    %v685 = vrot.slane %v553, %v684
    %v686 = vlaneseq
    %v687 = vshrl.u32 %v686, 7
    %v688 = vsub.s32 %v677, %v687
    %v689 = vrot.slane %v556, %v688
    %v690 = vlaneseq
    %v691 = vshrl.u32 %v690, 7
    %v692 = vsub.s32 %v677, %v691
    %v693 = vrot.slane %v559, %v692
    %v694 = vlaneseq
    %v695 = vshrl.u32 %v694, 7
    %v696 = vsub.s32 %v677, %v695
    %v697 = vrot.slane %v562, %v696
    %v698 = vlaneseq
    %v699 = vshrl.u32 %v698, 7
    %v700 = vsub.s32 %v677, %v699
    %v701 = vrot.slane %v565, %v700
    %v702 = vlaneseq
    %v703 = vshrl.u32 %v702, 7
    %v704 = vsub.s32 %v677, %v703
    %v705 = vrot.slane %v568, %v704
    %v706 = vlaneseq
    %v707 = vshrl.u32 %v706, 7
    %v708 = vsub.s32 %v677, %v707
    %v709 = vrot.slane %v571, %v708
    %v710 = vlaneseq
    %v711 = vshrl.u32 %v710, 7
    %v712 = vsub.s32 %v677, %v711
    %v713 = vrot.slane %v574, %v712
    %v714 = vlaneseq
    %v715 = vshrl.u32 %v714, 7
    %v716 = vsub.s32 %v677, %v715
    %v717 = vrot.slane %v577, %v716
    %v718 = vlaneseq
    %v719 = vshrl.u32 %v718, 7
    %v720 = vsub.s32 %v677, %v719
    %v721 = vrot.slane %v580, %v720
    %v722 = vlaneseq
    %v723 = vshrl.u32 %v722, 7
    %v724 = vsub.s32 %v677, %v723
    %v725 = vrot.slane %v583, %v724
    %v726 = vlaneseq
    %v727 = vshrl.u32 %v726, 7
    %v728 = vsub.s32 %v677, %v727
    %v729 = vrot.slane %v586, %v728
    %v730 = vlaneseq
    %v731 = vshrl.u32 %v730, 7
    %v732 = vsub.s32 %v677, %v731
    %v733 = vrot.slane %v589, %v732
    %v734 = vlaneseq
    %v735 = vshrl.u32 %v734, 7
    %v736 = vsub.s32 %v677, %v735
    %v737 = vrot.slane %v592, %v736
    %v738 = vlaneseq
    %v739 = vshrl.u32 %v738, 7
    %v740 = vsub.s32 %v677, %v739
    %v741 = vrot.slane %v595, %v740
    %v742 = vlaneseq
    %v743 = vshrl.u32 %v742, 7
    %v744 = vsub.s32 %v677, %v743
    %v745 = vrot.slane %v598, %v744
    %v746 = vlaneseq
    %v747 = vshrl.u32 %v746, 7
    %v748 = vsub.s32 %v677, %v747
    %v749 = vrot.slane %v601, %v748
    %v750 = vlaneseq
    %v751 = vshrl.u32 %v750, 7
    %v752 = vsub.s32 %v677, %v751
    %v753 = vrot.slane %v604, %v752
    %v754 = vlaneseq
    %v755 = vshrl.u32 %v754, 7
    %v756 = vsub.s32 %v677, %v755
    %v757 = vrot.slane %v607, %v756
    %v758 = vlaneseq
    %v759 = vshrl.u32 %v758, 7
    %v760 = vsub.s32 %v677, %v759
    %v761 = vrot.slane %v610, %v760
    %v762 = vlaneseq
    %v763 = vshrl.u32 %v762, 7
    %v764 = vsub.s32 %v677, %v763
    %v765 = vrot.slane %v613, %v764
    %v766 = vlaneseq
    %v767 = vshrl.u32 %v766, 7
    %v768 = vsub.s32 %v677, %v767
    %v769 = vrot.slane %v616, %v768
    %v770 = vlaneseq
    %v771 = vshrl.u32 %v770, 7
    %v772 = vsub.s32 %v677, %v771
    %v773 = vrot.slane %v619, %v772
    %v774 = vlaneseq
    %v775 = vshrl.u32 %v774, 7
    %v776 = vsub.s32 %v677, %v775
    %v777 = vrot.slane %v622, %v776
    %v778 = vlaneseq
    %v779 = vshrl.u32 %v778, 7
    %v780 = vsub.s32 %v677, %v779
    %v781 = vrot.slane %v625, %v780
    %v782 = vlaneseq
    %v783 = vshrl.u32 %v782, 7
    %v784 = vsub.s32 %v677, %v783
    %v785 = vrot.slane %v628, %v784
    %v786 = vlaneseq
    %v787 = vshrl.u32 %v786, 7
    %v788 = vsub.s32 %v677, %v787
    %v789 = vrot.slane %v631, %v788
    %v790 = vlaneseq
    %v791 = vshrl.u32 %v790, 7
    %v792 = vsub.s32 %v677, %v791
    %v793 = vrot.slane %v634, %v792
    %v794 = vlaneseq
    %v795 = vshrl.u32 %v794, 7
    %v796 = vsub.s32 %v677, %v795
    %v797 = vrot.slane %v637, %v796
    %v798 = vlaneseq
    %v799 = vshrl.u32 %v798, 7
    %v800 = vsub.s32 %v677, %v799
    %v801 = vrot.slane %v640, %v800
    %v802 = vlaneseq
    %v803 = vshrl.u32 %v802, 7
    %v804 = vsub.s32 %v677, %v803
    %v805 = vrot.slane %v643, %v804
    %vm806 = vcmask 1041409
    %v807 = vsel %vm806, %v685, %v681
    %vm808 = vcmask 1042434
    %v809 = vsel %vm808, %v689, %v807
    %vm810 = vcmask 1043459
    %v811 = vsel %vm810, %v693, %v809
    %vm812 = vcmask 1044484
    %v813 = vsel %vm812, %v697, %v811
    %vm814 = vcmask 1045509
    %v815 = vsel %vm814, %v701, %v813
    %vm816 = vcmask 1046534
    %v817 = vsel %vm816, %v705, %v815
    %vm818 = vcmask 1047559
    %v819 = vsel %vm818, %v709, %v817
    %v820 = vsel %vm806, %v717, %v713
    %v821 = vsel %vm808, %v721, %v820
    %v822 = vsel %vm810, %v725, %v821
    %v823 = vsel %vm812, %v729, %v822
    %v824 = vsel %vm814, %v733, %v823
    %v825 = vsel %vm816, %v737, %v824
    %v826 = vsel %vm818, %v741, %v825
    %v827 = vsel %vm806, %v749, %v745
    %v828 = vsel %vm808, %v753, %v827
    %v829 = vsel %vm810, %v757, %v828
    %v830 = vsel %vm812, %v761, %v829
    %v831 = vsel %vm814, %v765, %v830
    %v832 = vsel %vm816, %v769, %v831
    %v833 = vsel %vm818, %v773, %v832
    %v834 = vsel %vm806, %v781, %v777
    %v835 = vsel %vm808, %v785, %v834
    %v836 = vsel %vm810, %v789, %v835
    %v837 = vsel %vm812, %v793, %v836
    %v838 = vsel %vm814, %v797, %v837
    %v839 = vsel %vm816, %v801, %v838
    %v840 = vsel %vm818, %v805, %v839
    %v845 = vadd.f32 %v538, %v819
    %v846 = vadd.f32 %v541, %v826
    %v847 = vadd.f32 %v544, %v833
    %v848 = vadd.f32 %v547, %v840
    %vm849 = vcmp.gt.f32.partialorder %v845, 0.0
    %vm850 = vcmp.gt.f32.partialorder %v846, 0.0
    %vm851 = vcmp.gt.f32.partialorder %v847, 0.0
    %vm852 = vcmp.gt.f32.partialorder %v848, 0.0
    %v853 = vmul.f32 %v845, 0.2
    %v854 = vmul.f32 %v846, 0.2
    %v855 = vmul.f32 %v847, 0.2
    %v856 = vmul.f32 %v848, 0.2
    %v857 = vsel %vm849, %v845, %v853
    %v858 = vsel %vm850, %v846, %v854
    %v859 = vsel %vm851, %v847, %v855
    %v860 = vsel %vm852, %v848, %v856
    %v861 = vsel %vm535, %v857, -inf
    %862 = vmax.xlane.f32.xlu0 %v861
    %v863 = vpop.xlane.xlu0 %862
    %v864 = vsel %vm535, %v858, -inf
    %865 = vmax.xlane.f32.xlu0 %v864
    %v866 = vpop.xlane.xlu0 %865
    %v867 = vsel %vm535, %v859, -inf
    %868 = vmax.xlane.f32.xlu0 %v867
    %v869 = vpop.xlane.xlu0 %868
    %v870 = vsel %vm535, %v860, -inf
    %871 = vmax.xlane.f32.xlu0 %v870
    %v872 = vpop.xlane.xlu0 %871
    %v873 = vsub.f32 %v857, %v863
    %v874 = vsub.f32 %v858, %v866
    %v875 = vsub.f32 %v859, %v869
    %v876 = vsub.f32 %v860, %v872
    %v877 = vmul.f32 %v873, 1.442695
    %v878 = vpow.pop %v877
    %v879 = vmul.f32 %v874, 1.442695
    %v880 = vpow.pop %v879
    %v881 = vmul.f32 %v875, 1.442695
    %v882 = vpow.pop %v881
    %v883 = vmul.f32 %v876, 1.442695
    %v884 = vpow.pop %v883
    %v885 = vsel %vm535, %v878, 0.0
    %886 = vadd.xlane.f32.xlu0 %v885
    %v887 = vpop.xlane.xlu0 %886
    %v888 = vsel %vm535, %v880, 0.0
    %889 = vadd.xlane.f32.xlu0 %v888
    %v890 = vpop.xlane.xlu0 %889
    %v891 = vsel %vm535, %v882, 0.0
    %892 = vadd.xlane.f32.xlu0 %v891
    %v893 = vpop.xlane.xlu0 %892
    %v894 = vsel %vm535, %v884, 0.0
    %895 = vadd.xlane.f32.xlu0 %v894
    %v896 = vpop.xlane.xlu0 %895
    %v897 = vrcp.pop %v887
    %v898 = vrcp.pop %v890
    %v899 = vrcp.pop %v893
    %v900 = vrcp.pop %v896
    %v901 = vmul.f32 %v878, %v897
    %v902 = vmul.f32 %v880, %v898
    %v903 = vmul.f32 %v882, %v899
    %v904 = vmul.f32 %v884, %v900
    %v905 = vlaneseq
    %v906 = vshrl.u32 %v905, 7
    %v907 = vsub.s32 0, %v906
    %v908 = vrot.slane %v901, %v907
    %910 = vbcast.lane.b32.xlu0 %v908, 256
    %v911 = vpop.permute.xlu0 %910
    %v912 = vlaneseq
    %v913 = vshrl.u32 %v912, 7
    %v914 = vsub.s32 1, %v913
    %v915 = vrot.slane %v901, %v914
    %917 = vbcast.lane.b32.xlu0 %v915, 256
    %v918 = vpop.permute.xlu0 %917
    %v919 = vlaneseq
    %v920 = vshrl.u32 %v919, 7
    %v921 = vsub.s32 2, %v920
    %v922 = vrot.slane %v901, %v921
    %924 = vbcast.lane.b32.xlu0 %v922, 256
    %v925 = vpop.permute.xlu0 %924
    %v926 = vlaneseq
    %v927 = vshrl.u32 %v926, 7
    %v928 = vsub.s32 3, %v927
    %v929 = vrot.slane %v901, %v928
    %931 = vbcast.lane.b32.xlu0 %v929, 256
    %v932 = vpop.permute.xlu0 %931
    %v933 = vlaneseq
    %v934 = vshrl.u32 %v933, 7
    %v935 = vsub.s32 4, %v934
    %v936 = vrot.slane %v901, %v935
    %938 = vbcast.lane.b32.xlu0 %v936, 256
    %v939 = vpop.permute.xlu0 %938
    %v940 = vlaneseq
    %v941 = vshrl.u32 %v940, 7
    %v942 = vsub.s32 5, %v941
    %v943 = vrot.slane %v901, %v942
    %945 = vbcast.lane.b32.xlu0 %v943, 256
    %v946 = vpop.permute.xlu0 %945
    %v947 = vlaneseq
    %v948 = vshrl.u32 %v947, 7
    %v949 = vsub.s32 6, %v948
    %v950 = vrot.slane %v901, %v949
    %952 = vbcast.lane.b32.xlu0 %v950, 256
    %v953 = vpop.permute.xlu0 %952
    %v954 = vlaneseq
    %v955 = vshrl.u32 %v954, 7
    %v956 = vsub.s32 7, %v955
    %v957 = vrot.slane %v901, %v956
    %959 = vbcast.lane.b32.xlu0 %v957, 256
    %v960 = vpop.permute.xlu0 %959
    %v961 = vlaneseq
    %v962 = vshrl.u32 %v961, 7
    %v963 = vsub.s32 0, %v962
    %v964 = vrot.slane %v902, %v963
    %966 = vbcast.lane.b32.xlu0 %v964, 256
    %v967 = vpop.permute.xlu0 %966
    %v968 = vlaneseq
    %v969 = vshrl.u32 %v968, 7
    %v970 = vsub.s32 1, %v969
    %v971 = vrot.slane %v902, %v970
    %973 = vbcast.lane.b32.xlu0 %v971, 256
    %v974 = vpop.permute.xlu0 %973
    %v975 = vlaneseq
    %v976 = vshrl.u32 %v975, 7
    %v977 = vsub.s32 2, %v976
    %v978 = vrot.slane %v902, %v977
    %980 = vbcast.lane.b32.xlu0 %v978, 256
    %v981 = vpop.permute.xlu0 %980
    %v982 = vlaneseq
    %v983 = vshrl.u32 %v982, 7
    %v984 = vsub.s32 3, %v983
    %v985 = vrot.slane %v902, %v984
    %987 = vbcast.lane.b32.xlu0 %v985, 256
    %v988 = vpop.permute.xlu0 %987
    %v989 = vlaneseq
    %v990 = vshrl.u32 %v989, 7
    %v991 = vsub.s32 4, %v990
    %v992 = vrot.slane %v902, %v991
    %994 = vbcast.lane.b32.xlu0 %v992, 256
    %v995 = vpop.permute.xlu0 %994
    %v996 = vlaneseq
    %v997 = vshrl.u32 %v996, 7
    %v998 = vsub.s32 5, %v997
    %v999 = vrot.slane %v902, %v998
    %1001 = vbcast.lane.b32.xlu0 %v999, 256
    %v1002 = vpop.permute.xlu0 %1001
    %v1003 = vlaneseq
    %v1004 = vshrl.u32 %v1003, 7
    %v1005 = vsub.s32 6, %v1004
    %v1006 = vrot.slane %v902, %v1005
    %1008 = vbcast.lane.b32.xlu0 %v1006, 256
    %v1009 = vpop.permute.xlu0 %1008
    %v1010 = vlaneseq
    %v1011 = vshrl.u32 %v1010, 7
    %v1012 = vsub.s32 7, %v1011
    %v1013 = vrot.slane %v902, %v1012
    %1015 = vbcast.lane.b32.xlu0 %v1013, 256
    %v1016 = vpop.permute.xlu0 %1015
    %v1017 = vlaneseq
    %v1018 = vshrl.u32 %v1017, 7
    %v1019 = vsub.s32 0, %v1018
    %v1020 = vrot.slane %v903, %v1019
    %1022 = vbcast.lane.b32.xlu0 %v1020, 256
    %v1023 = vpop.permute.xlu0 %1022
    %v1024 = vlaneseq
    %v1025 = vshrl.u32 %v1024, 7
    %v1026 = vsub.s32 1, %v1025
    %v1027 = vrot.slane %v903, %v1026
    %1029 = vbcast.lane.b32.xlu0 %v1027, 256
    %v1030 = vpop.permute.xlu0 %1029
    %v1031 = vlaneseq
    %v1032 = vshrl.u32 %v1031, 7
    %v1033 = vsub.s32 2, %v1032
    %v1034 = vrot.slane %v903, %v1033
    %1036 = vbcast.lane.b32.xlu0 %v1034, 256
    %v1037 = vpop.permute.xlu0 %1036
    %v1038 = vlaneseq
    %v1039 = vshrl.u32 %v1038, 7
    %v1040 = vsub.s32 3, %v1039
    %v1041 = vrot.slane %v903, %v1040
    %1043 = vbcast.lane.b32.xlu0 %v1041, 256
    %v1044 = vpop.permute.xlu0 %1043
    %v1045 = vlaneseq
    %v1046 = vshrl.u32 %v1045, 7
    %v1047 = vsub.s32 4, %v1046
    %v1048 = vrot.slane %v903, %v1047
    %1050 = vbcast.lane.b32.xlu0 %v1048, 256
    %v1051 = vpop.permute.xlu0 %1050
    %v1052 = vlaneseq
    %v1053 = vshrl.u32 %v1052, 7
    %v1054 = vsub.s32 5, %v1053
    %v1055 = vrot.slane %v903, %v1054
    %1057 = vbcast.lane.b32.xlu0 %v1055, 256
    %v1058 = vpop.permute.xlu0 %1057
    %v1059 = vlaneseq
    %v1060 = vshrl.u32 %v1059, 7
    %v1061 = vsub.s32 6, %v1060
    %v1062 = vrot.slane %v903, %v1061
    %1064 = vbcast.lane.b32.xlu0 %v1062, 256
    %v1065 = vpop.permute.xlu0 %1064
    %v1066 = vlaneseq
    %v1067 = vshrl.u32 %v1066, 7
    %v1068 = vsub.s32 7, %v1067
    %v1069 = vrot.slane %v903, %v1068
    %1071 = vbcast.lane.b32.xlu0 %v1069, 256
    %v1072 = vpop.permute.xlu0 %1071
    %v1073 = vlaneseq
    %v1074 = vshrl.u32 %v1073, 7
    %v1075 = vsub.s32 0, %v1074
    %v1076 = vrot.slane %v904, %v1075
    %1078 = vbcast.lane.b32.xlu0 %v1076, 256
    %v1079 = vpop.permute.xlu0 %1078
    %v1080 = vlaneseq
    %v1081 = vshrl.u32 %v1080, 7
    %v1082 = vsub.s32 1, %v1081
    %v1083 = vrot.slane %v904, %v1082
    %1085 = vbcast.lane.b32.xlu0 %v1083, 256
    %v1086 = vpop.permute.xlu0 %1085
    %v1087 = vlaneseq
    %v1088 = vshrl.u32 %v1087, 7
    %v1089 = vsub.s32 2, %v1088
    %v1090 = vrot.slane %v904, %v1089
    %1092 = vbcast.lane.b32.xlu0 %v1090, 256
    %v1093 = vpop.permute.xlu0 %1092
    %v1094 = vlaneseq
    %v1095 = vshrl.u32 %v1094, 7
    %v1096 = vsub.s32 3, %v1095
    %v1097 = vrot.slane %v904, %v1096
    %1099 = vbcast.lane.b32.xlu0 %v1097, 256
    %v1100 = vpop.permute.xlu0 %1099
    %v1101 = vlaneseq
    %v1102 = vshrl.u32 %v1101, 7
    %v1103 = vsub.s32 4, %v1102
    %v1104 = vrot.slane %v904, %v1103
    %1106 = vbcast.lane.b32.xlu0 %v1104, 256
    %v1107 = vpop.permute.xlu0 %1106
    %v1108 = vlaneseq
    %v1109 = vshrl.u32 %v1108, 7
    %v1110 = vsub.s32 5, %v1109
    %v1111 = vrot.slane %v904, %v1110
    %1113 = vbcast.lane.b32.xlu0 %v1111, 256
    %v1114 = vpop.permute.xlu0 %1113
    %v1115 = vlaneseq
    %v1116 = vshrl.u32 %v1115, 7
    %v1117 = vsub.s32 6, %v1116
    %v1118 = vrot.slane %v904, %v1117
    %1120 = vbcast.lane.b32.xlu0 %v1118, 256
    %v1121 = vpop.permute.xlu0 %1120
    %v1122 = vlaneseq
    %v1123 = vshrl.u32 %v1122, 7
    %v1124 = vsub.s32 7, %v1123
    %v1125 = vrot.slane %v904, %v1124
    %1127 = vbcast.lane.b32.xlu0 %v1125, 256
    %v1128 = vpop.permute.xlu0 %1127
    %v1129 = vmul.f32 %v911, %v329
    %v1130 = vmul.f32 %v918, %v334
    %v1131 = vmul.f32 %v925, %v339
    %v1132 = vmul.f32 %v932, %v344
    %v1133 = vmul.f32 %v939, %v349
    %v1134 = vmul.f32 %v946, %v354
    %v1135 = vmul.f32 %v953, %v359
    %v1136 = vmul.f32 %v960, %v364
    %v1137 = vmul.f32 %v967, %v369
    %v1138 = vmul.f32 %v974, %v374
    %v1139 = vmul.f32 %v981, %v379
    %v1140 = vmul.f32 %v988, %v384
    %v1141 = vmul.f32 %v995, %v389
    %v1142 = vmul.f32 %v1002, %v394
    %v1143 = vmul.f32 %v1009, %v399
    %v1144 = vmul.f32 %v1016, %v404
    %v1145 = vmul.f32 %v1023, %v409
    %v1146 = vmul.f32 %v1030, %v414
    %v1147 = vmul.f32 %v1037, %v419
    %v1148 = vmul.f32 %v1044, %v424
    %v1149 = vmul.f32 %v1051, %v429
    %v1150 = vmul.f32 %v1058, %v434
    %v1151 = vmul.f32 %v1065, %v439
    %v1152 = vmul.f32 %v1072, %v444
    %v1153 = vmul.f32 %v1079, %v449
    %v1154 = vmul.f32 %v1086, %v454
    %v1155 = vmul.f32 %v1093, %v459
    %v1156 = vmul.f32 %v1100, %v464
    %v1157 = vmul.f32 %v1107, %v469
    %v1158 = vmul.f32 %v1114, %v474
    %v1159 = vmul.f32 %v1121, %v479
    %v1160 = vmul.f32 %v1128, %v484
    %v1161 = vsel %vm535, %v1129, 0.0
    %v1162 = vrot.slane %v1161, 4
    %v1163 = vadd.f32 %v1161, %v1162
    %v1164 = vrot.slane %v1163, 2
    %v1165 = vadd.f32 %v1163, %v1164
    %v1166 = vrot.slane %v1165, 1
    %v1167 = vadd.f32 %v1165, %v1166
    %v1168 = vsel %vm535, %v1130, 0.0
    %v1169 = vrot.slane %v1168, 4
    %v1170 = vadd.f32 %v1168, %v1169
    %v1171 = vrot.slane %v1170, 2
    %v1172 = vadd.f32 %v1170, %v1171
    %v1173 = vrot.slane %v1172, 1
    %v1174 = vadd.f32 %v1172, %v1173
    %v1175 = vsel %vm535, %v1131, 0.0
    %v1176 = vrot.slane %v1175, 4
    %v1177 = vadd.f32 %v1175, %v1176
    %v1178 = vrot.slane %v1177, 2
    %v1179 = vadd.f32 %v1177, %v1178
    %v1180 = vrot.slane %v1179, 1
    %v1181 = vadd.f32 %v1179, %v1180
    %v1182 = vsel %vm535, %v1132, 0.0
    %v1183 = vrot.slane %v1182, 4
    %v1184 = vadd.f32 %v1182, %v1183
    %v1185 = vrot.slane %v1184, 2
    %v1186 = vadd.f32 %v1184, %v1185
    %v1187 = vrot.slane %v1186, 1
    %v1188 = vadd.f32 %v1186, %v1187
    %v1189 = vsel %vm535, %v1133, 0.0
    %v1190 = vrot.slane %v1189, 4
    %v1191 = vadd.f32 %v1189, %v1190
    %v1192 = vrot.slane %v1191, 2
    %v1193 = vadd.f32 %v1191, %v1192
    %v1194 = vrot.slane %v1193, 1
    %v1195 = vadd.f32 %v1193, %v1194
    %v1196 = vsel %vm535, %v1134, 0.0
    %v1197 = vrot.slane %v1196, 4
    %v1198 = vadd.f32 %v1196, %v1197
    %v1199 = vrot.slane %v1198, 2
    %v1200 = vadd.f32 %v1198, %v1199
    %v1201 = vrot.slane %v1200, 1
    %v1202 = vadd.f32 %v1200, %v1201
    %v1203 = vsel %vm535, %v1135, 0.0
    %v1204 = vrot.slane %v1203, 4
    %v1205 = vadd.f32 %v1203, %v1204
    %v1206 = vrot.slane %v1205, 2
    %v1207 = vadd.f32 %v1205, %v1206
    %v1208 = vrot.slane %v1207, 1
    %v1209 = vadd.f32 %v1207, %v1208
    %v1210 = vsel %vm535, %v1136, 0.0
    %v1211 = vrot.slane %v1210, 4
    %v1212 = vadd.f32 %v1210, %v1211
    %v1213 = vrot.slane %v1212, 2
    %v1214 = vadd.f32 %v1212, %v1213
    %v1215 = vrot.slane %v1214, 1
    %v1216 = vadd.f32 %v1214, %v1215
    %v1217 = vsel %vm535, %v1137, 0.0
    %v1218 = vrot.slane %v1217, 4
    %v1219 = vadd.f32 %v1217, %v1218
    %v1220 = vrot.slane %v1219, 2
    %v1221 = vadd.f32 %v1219, %v1220
    %v1222 = vrot.slane %v1221, 1
    %v1223 = vadd.f32 %v1221, %v1222
    %v1224 = vsel %vm535, %v1138, 0.0
    %v1225 = vrot.slane %v1224, 4
    %v1226 = vadd.f32 %v1224, %v1225
    %v1227 = vrot.slane %v1226, 2
    %v1228 = vadd.f32 %v1226, %v1227
    %v1229 = vrot.slane %v1228, 1
    %v1230 = vadd.f32 %v1228, %v1229
    %v1231 = vsel %vm535, %v1139, 0.0
    %v1232 = vrot.slane %v1231, 4
    %v1233 = vadd.f32 %v1231, %v1232
    %v1234 = vrot.slane %v1233, 2
    %v1235 = vadd.f32 %v1233, %v1234
    %v1236 = vrot.slane %v1235, 1
    %v1237 = vadd.f32 %v1235, %v1236
    %v1238 = vsel %vm535, %v1140, 0.0
    %v1239 = vrot.slane %v1238, 4
    %v1240 = vadd.f32 %v1238, %v1239
    %v1241 = vrot.slane %v1240, 2
    %v1242 = vadd.f32 %v1240, %v1241
    %v1243 = vrot.slane %v1242, 1
    %v1244 = vadd.f32 %v1242, %v1243
    %v1245 = vsel %vm535, %v1141, 0.0
    %v1246 = vrot.slane %v1245, 4
    %v1247 = vadd.f32 %v1245, %v1246
    %v1248 = vrot.slane %v1247, 2
    %v1249 = vadd.f32 %v1247, %v1248
    %v1250 = vrot.slane %v1249, 1
    %v1251 = vadd.f32 %v1249, %v1250
    %v1252 = vsel %vm535, %v1142, 0.0
    %v1253 = vrot.slane %v1252, 4
    %v1254 = vadd.f32 %v1252, %v1253
    %v1255 = vrot.slane %v1254, 2
    %v1256 = vadd.f32 %v1254, %v1255
    %v1257 = vrot.slane %v1256, 1
    %v1258 = vadd.f32 %v1256, %v1257
    %v1259 = vsel %vm535, %v1143, 0.0
    %v1260 = vrot.slane %v1259, 4
    %v1261 = vadd.f32 %v1259, %v1260
    %v1262 = vrot.slane %v1261, 2
    %v1263 = vadd.f32 %v1261, %v1262
    %v1264 = vrot.slane %v1263, 1
    %v1265 = vadd.f32 %v1263, %v1264
    %v1266 = vsel %vm535, %v1144, 0.0
    %v1267 = vrot.slane %v1266, 4
    %v1268 = vadd.f32 %v1266, %v1267
    %v1269 = vrot.slane %v1268, 2
    %v1270 = vadd.f32 %v1268, %v1269
    %v1271 = vrot.slane %v1270, 1
    %v1272 = vadd.f32 %v1270, %v1271
    %v1273 = vsel %vm535, %v1145, 0.0
    %v1274 = vrot.slane %v1273, 4
    %v1275 = vadd.f32 %v1273, %v1274
    %v1276 = vrot.slane %v1275, 2
    %v1277 = vadd.f32 %v1275, %v1276
    %v1278 = vrot.slane %v1277, 1
    %v1279 = vadd.f32 %v1277, %v1278
    %v1280 = vsel %vm535, %v1146, 0.0
    %v1281 = vrot.slane %v1280, 4
    %v1282 = vadd.f32 %v1280, %v1281
    %v1283 = vrot.slane %v1282, 2
    %v1284 = vadd.f32 %v1282, %v1283
    %v1285 = vrot.slane %v1284, 1
    %v1286 = vadd.f32 %v1284, %v1285
    %v1287 = vsel %vm535, %v1147, 0.0
    %v1288 = vrot.slane %v1287, 4
    %v1289 = vadd.f32 %v1287, %v1288
    %v1290 = vrot.slane %v1289, 2
    %v1291 = vadd.f32 %v1289, %v1290
    %v1292 = vrot.slane %v1291, 1
    %v1293 = vadd.f32 %v1291, %v1292
    %v1294 = vsel %vm535, %v1148, 0.0
    %v1295 = vrot.slane %v1294, 4
    %v1296 = vadd.f32 %v1294, %v1295
    %v1297 = vrot.slane %v1296, 2
    %v1298 = vadd.f32 %v1296, %v1297
    %v1299 = vrot.slane %v1298, 1
    %v1300 = vadd.f32 %v1298, %v1299
    %v1301 = vsel %vm535, %v1149, 0.0
    %v1302 = vrot.slane %v1301, 4
    %v1303 = vadd.f32 %v1301, %v1302
    %v1304 = vrot.slane %v1303, 2
    %v1305 = vadd.f32 %v1303, %v1304
    %v1306 = vrot.slane %v1305, 1
    %v1307 = vadd.f32 %v1305, %v1306
    %v1308 = vsel %vm535, %v1150, 0.0
    %v1309 = vrot.slane %v1308, 4
    %v1310 = vadd.f32 %v1308, %v1309
    %v1311 = vrot.slane %v1310, 2
    %v1312 = vadd.f32 %v1310, %v1311
    %v1313 = vrot.slane %v1312, 1
    %v1314 = vadd.f32 %v1312, %v1313
    %v1315 = vsel %vm535, %v1151, 0.0
    %v1316 = vrot.slane %v1315, 4
    %v1317 = vadd.f32 %v1315, %v1316
    %v1318 = vrot.slane %v1317, 2
    %v1319 = vadd.f32 %v1317, %v1318
    %v1320 = vrot.slane %v1319, 1
    %v1321 = vadd.f32 %v1319, %v1320
    %v1322 = vsel %vm535, %v1152, 0.0
    %v1323 = vrot.slane %v1322, 4
    %v1324 = vadd.f32 %v1322, %v1323
    %v1325 = vrot.slane %v1324, 2
    %v1326 = vadd.f32 %v1324, %v1325
    %v1327 = vrot.slane %v1326, 1
    %v1328 = vadd.f32 %v1326, %v1327
    %v1329 = vsel %vm535, %v1153, 0.0
    %v1330 = vrot.slane %v1329, 4
    %v1331 = vadd.f32 %v1329, %v1330
    %v1332 = vrot.slane %v1331, 2
    %v1333 = vadd.f32 %v1331, %v1332
    %v1334 = vrot.slane %v1333, 1
    %v1335 = vadd.f32 %v1333, %v1334
    %v1336 = vsel %vm535, %v1154, 0.0
    %v1337 = vrot.slane %v1336, 4
    %v1338 = vadd.f32 %v1336, %v1337
    %v1339 = vrot.slane %v1338, 2
    %v1340 = vadd.f32 %v1338, %v1339
    %v1341 = vrot.slane %v1340, 1
    %v1342 = vadd.f32 %v1340, %v1341
    %v1343 = vsel %vm535, %v1155, 0.0
    %v1344 = vrot.slane %v1343, 4
    %v1345 = vadd.f32 %v1343, %v1344
    %v1346 = vrot.slane %v1345, 2
    %v1347 = vadd.f32 %v1345, %v1346
    %v1348 = vrot.slane %v1347, 1
    %v1349 = vadd.f32 %v1347, %v1348
    %v1350 = vsel %vm535, %v1156, 0.0
    %v1351 = vrot.slane %v1350, 4
    %v1352 = vadd.f32 %v1350, %v1351
    %v1353 = vrot.slane %v1352, 2
    %v1354 = vadd.f32 %v1352, %v1353
    %v1355 = vrot.slane %v1354, 1
    %v1356 = vadd.f32 %v1354, %v1355
    %v1357 = vsel %vm535, %v1157, 0.0
    %v1358 = vrot.slane %v1357, 4
    %v1359 = vadd.f32 %v1357, %v1358
    %v1360 = vrot.slane %v1359, 2
    %v1361 = vadd.f32 %v1359, %v1360
    %v1362 = vrot.slane %v1361, 1
    %v1363 = vadd.f32 %v1361, %v1362
    %v1364 = vsel %vm535, %v1158, 0.0
    %v1365 = vrot.slane %v1364, 4
    %v1366 = vadd.f32 %v1364, %v1365
    %v1367 = vrot.slane %v1366, 2
    %v1368 = vadd.f32 %v1366, %v1367
    %v1369 = vrot.slane %v1368, 1
    %v1370 = vadd.f32 %v1368, %v1369
    %v1371 = vsel %vm535, %v1159, 0.0
    %v1372 = vrot.slane %v1371, 4
    %v1373 = vadd.f32 %v1371, %v1372
    %v1374 = vrot.slane %v1373, 2
    %v1375 = vadd.f32 %v1373, %v1374
    %v1376 = vrot.slane %v1375, 1
    %v1377 = vadd.f32 %v1375, %v1376
    %v1378 = vsel %vm535, %v1160, 0.0
    %v1379 = vrot.slane %v1378, 4
    %v1380 = vadd.f32 %v1378, %v1379
    %v1381 = vrot.slane %v1380, 2
    %v1382 = vadd.f32 %v1380, %v1381
    %v1383 = vrot.slane %v1382, 1
    %v1384 = vadd.f32 %v1382, %v1383
    %1389 = vrot.lane.b32.xlu0 %v493, 120
    %v1390 = vpop.permute.xlu0 %1389
    %1391 = vrot.lane.b32.xlu0 %v494, 120
    %v1392 = vpop.permute.xlu0 %1391
    %1393 = vrot.lane.b32.xlu0 %v495, 120
    %v1394 = vpop.permute.xlu0 %1393
    %1395 = vrot.lane.b32.xlu0 %v496, 120
    %v1396 = vpop.permute.xlu0 %1395
    %v1401 = vsel %vm535, %v1390, 0.0
    %1402 = vadd.xlane.f32.xlu0 %v1401
    %v1403 = vpop.xlane.xlu0 %1402
    %v1404 = vsel %vm535, %v1392, 0.0
    %1405 = vadd.xlane.f32.xlu0 %v1404
    %v1406 = vpop.xlane.xlu0 %1405
    %v1407 = vsel %vm535, %v1394, 0.0
    %1408 = vadd.xlane.f32.xlu0 %v1407
    %v1409 = vpop.xlane.xlu0 %1408
    %v1410 = vsel %vm535, %v1396, 0.0
    %1411 = vadd.xlane.f32.xlu0 %v1410
    %v1412 = vpop.xlane.xlu0 %1411
    %1445 = vrot.lane.b32.xlu0 %v503, 120
    %v1446 = vpop.permute.xlu0 %1445
    %1447 = vrot.lane.b32.xlu0 %v504, 120
    %v1448 = vpop.permute.xlu0 %1447
    %1449 = vrot.lane.b32.xlu0 %v505, 120
    %v1450 = vpop.permute.xlu0 %1449
    %1451 = vrot.lane.b32.xlu0 %v506, 120
    %v1452 = vpop.permute.xlu0 %1451
    %1453 = vrot.lane.b32.xlu0 %v507, 120
    %v1454 = vpop.permute.xlu0 %1453
    %1455 = vrot.lane.b32.xlu0 %v508, 120
    %v1456 = vpop.permute.xlu0 %1455
    %1457 = vrot.lane.b32.xlu0 %v509, 120
    %v1458 = vpop.permute.xlu0 %1457
    %1459 = vrot.lane.b32.xlu0 %v510, 120
    %v1460 = vpop.permute.xlu0 %1459
    %1461 = vrot.lane.b32.xlu0 %v511, 120
    %v1462 = vpop.permute.xlu0 %1461
    %1463 = vrot.lane.b32.xlu0 %v512, 120
    %v1464 = vpop.permute.xlu0 %1463
    %1465 = vrot.lane.b32.xlu0 %v513, 120
    %v1466 = vpop.permute.xlu0 %1465
    %1467 = vrot.lane.b32.xlu0 %v514, 120
    %v1468 = vpop.permute.xlu0 %1467
    %1469 = vrot.lane.b32.xlu0 %v515, 120
    %v1470 = vpop.permute.xlu0 %1469
    %1471 = vrot.lane.b32.xlu0 %v516, 120
    %v1472 = vpop.permute.xlu0 %1471
    %1473 = vrot.lane.b32.xlu0 %v517, 120
    %v1474 = vpop.permute.xlu0 %1473
    %1475 = vrot.lane.b32.xlu0 %v518, 120
    %v1476 = vpop.permute.xlu0 %1475
    %1477 = vrot.lane.b32.xlu0 %v519, 120
    %v1478 = vpop.permute.xlu0 %1477
    %1479 = vrot.lane.b32.xlu0 %v520, 120
    %v1480 = vpop.permute.xlu0 %1479
    %1481 = vrot.lane.b32.xlu0 %v521, 120
    %v1482 = vpop.permute.xlu0 %1481
    %1483 = vrot.lane.b32.xlu0 %v522, 120
    %v1484 = vpop.permute.xlu0 %1483
    %1485 = vrot.lane.b32.xlu0 %v523, 120
    %v1486 = vpop.permute.xlu0 %1485
    %1487 = vrot.lane.b32.xlu0 %v524, 120
    %v1488 = vpop.permute.xlu0 %1487
    %1489 = vrot.lane.b32.xlu0 %v525, 120
    %v1490 = vpop.permute.xlu0 %1489
    %1491 = vrot.lane.b32.xlu0 %v526, 120
    %v1492 = vpop.permute.xlu0 %1491
    %1493 = vrot.lane.b32.xlu0 %v527, 120
    %v1494 = vpop.permute.xlu0 %1493
    %1495 = vrot.lane.b32.xlu0 %v528, 120
    %v1496 = vpop.permute.xlu0 %1495
    %1497 = vrot.lane.b32.xlu0 %v529, 120
    %v1498 = vpop.permute.xlu0 %1497
    %1499 = vrot.lane.b32.xlu0 %v530, 120
    %v1500 = vpop.permute.xlu0 %1499
    %1501 = vrot.lane.b32.xlu0 %v531, 120
    %v1502 = vpop.permute.xlu0 %1501
    %1503 = vrot.lane.b32.xlu0 %v532, 120
    %v1504 = vpop.permute.xlu0 %1503
    %1505 = vrot.lane.b32.xlu0 %v533, 120
    %v1506 = vpop.permute.xlu0 %1505
    %1507 = vrot.lane.b32.xlu0 %v534, 120
    %v1508 = vpop.permute.xlu0 %1507
    %v1541 = vsel %vm535, %v1446, 0.0
    %1542 = vadd.xlane.f32.xlu0 %v1541
    %v1543 = vpop.xlane.xlu0 %1542
    %v1544 = vsel %vm535, %v1448, 0.0
    %1545 = vadd.xlane.f32.xlu0 %v1544
    %v1546 = vpop.xlane.xlu0 %1545
    %v1547 = vsel %vm535, %v1450, 0.0
    %1548 = vadd.xlane.f32.xlu0 %v1547
    %v1549 = vpop.xlane.xlu0 %1548
    %v1550 = vsel %vm535, %v1452, 0.0
    %1551 = vadd.xlane.f32.xlu0 %v1550
    %v1552 = vpop.xlane.xlu0 %1551
    %v1553 = vsel %vm535, %v1454, 0.0
    %1554 = vadd.xlane.f32.xlu0 %v1553
    %v1555 = vpop.xlane.xlu0 %1554
    %v1556 = vsel %vm535, %v1456, 0.0
    %1557 = vadd.xlane.f32.xlu0 %v1556
    %v1558 = vpop.xlane.xlu0 %1557
    %v1559 = vsel %vm535, %v1458, 0.0
    %1560 = vadd.xlane.f32.xlu0 %v1559
    %v1561 = vpop.xlane.xlu0 %1560
    %v1562 = vsel %vm535, %v1460, 0.0
    %1563 = vadd.xlane.f32.xlu0 %v1562
    %v1564 = vpop.xlane.xlu0 %1563
    %v1565 = vsel %vm535, %v1462, 0.0
    %1566 = vadd.xlane.f32.xlu0 %v1565
    %v1567 = vpop.xlane.xlu0 %1566
    %v1568 = vsel %vm535, %v1464, 0.0
    %1569 = vadd.xlane.f32.xlu0 %v1568
    %v1570 = vpop.xlane.xlu0 %1569
    %v1571 = vsel %vm535, %v1466, 0.0
    %1572 = vadd.xlane.f32.xlu0 %v1571
    %v1573 = vpop.xlane.xlu0 %1572
    %v1574 = vsel %vm535, %v1468, 0.0
    %1575 = vadd.xlane.f32.xlu0 %v1574
    %v1576 = vpop.xlane.xlu0 %1575
    %v1577 = vsel %vm535, %v1470, 0.0
    %1578 = vadd.xlane.f32.xlu0 %v1577
    %v1579 = vpop.xlane.xlu0 %1578
    %v1580 = vsel %vm535, %v1472, 0.0
    %1581 = vadd.xlane.f32.xlu0 %v1580
    %v1582 = vpop.xlane.xlu0 %1581
    %v1583 = vsel %vm535, %v1474, 0.0
    %1584 = vadd.xlane.f32.xlu0 %v1583
    %v1585 = vpop.xlane.xlu0 %1584
    %v1586 = vsel %vm535, %v1476, 0.0
    %1587 = vadd.xlane.f32.xlu0 %v1586
    %v1588 = vpop.xlane.xlu0 %1587
    %v1589 = vsel %vm535, %v1478, 0.0
    %1590 = vadd.xlane.f32.xlu0 %v1589
    %v1591 = vpop.xlane.xlu0 %1590
    %v1592 = vsel %vm535, %v1480, 0.0
    %1593 = vadd.xlane.f32.xlu0 %v1592
    %v1594 = vpop.xlane.xlu0 %1593
    %v1595 = vsel %vm535, %v1482, 0.0
    %1596 = vadd.xlane.f32.xlu0 %v1595
    %v1597 = vpop.xlane.xlu0 %1596
    %v1598 = vsel %vm535, %v1484, 0.0
    %1599 = vadd.xlane.f32.xlu0 %v1598
    %v1600 = vpop.xlane.xlu0 %1599
    %v1601 = vsel %vm535, %v1486, 0.0
    %1602 = vadd.xlane.f32.xlu0 %v1601
    %v1603 = vpop.xlane.xlu0 %1602
    %v1604 = vsel %vm535, %v1488, 0.0
    %1605 = vadd.xlane.f32.xlu0 %v1604
    %v1606 = vpop.xlane.xlu0 %1605
    %v1607 = vsel %vm535, %v1490, 0.0
    %1608 = vadd.xlane.f32.xlu0 %v1607
    %v1609 = vpop.xlane.xlu0 %1608
    %v1610 = vsel %vm535, %v1492, 0.0
    %1611 = vadd.xlane.f32.xlu0 %v1610
    %v1612 = vpop.xlane.xlu0 %1611
    %v1613 = vsel %vm535, %v1494, 0.0
    %1614 = vadd.xlane.f32.xlu0 %v1613
    %v1615 = vpop.xlane.xlu0 %1614
    %v1616 = vsel %vm535, %v1496, 0.0
    %1617 = vadd.xlane.f32.xlu0 %v1616
    %v1618 = vpop.xlane.xlu0 %1617
    %v1619 = vsel %vm535, %v1498, 0.0
    %1620 = vadd.xlane.f32.xlu0 %v1619
    %v1621 = vpop.xlane.xlu0 %1620
    %v1622 = vsel %vm535, %v1500, 0.0
    %1623 = vadd.xlane.f32.xlu0 %v1622
    %v1624 = vpop.xlane.xlu0 %1623
    %v1625 = vsel %vm535, %v1502, 0.0
    %1626 = vadd.xlane.f32.xlu0 %v1625
    %v1627 = vpop.xlane.xlu0 %1626
    %v1628 = vsel %vm535, %v1504, 0.0
    %1629 = vadd.xlane.f32.xlu0 %v1628
    %v1630 = vpop.xlane.xlu0 %1629
    %v1631 = vsel %vm535, %v1506, 0.0
    %1632 = vadd.xlane.f32.xlu0 %v1631
    %v1633 = vpop.xlane.xlu0 %1632
    %v1634 = vsel %vm535, %v1508, 0.0
    %1635 = vadd.xlane.f32.xlu0 %v1634
    %v1636 = vpop.xlane.xlu0 %1635
    %v1669 = vlaneseq
    %v1670 = vshrl.u32 %v1669, 7
    %v1671 = vsub.s32 %v677, %v1670
    %v1672 = vrot.slane %v1543, %v1671
    %v1673 = vlaneseq
    %v1674 = vshrl.u32 %v1673, 7
    %v1675 = vsub.s32 %v677, %v1674
    %v1676 = vrot.slane %v1546, %v1675
    %v1677 = vlaneseq
    %v1678 = vshrl.u32 %v1677, 7
    %v1679 = vsub.s32 %v677, %v1678
    %v1680 = vrot.slane %v1549, %v1679
    %v1681 = vlaneseq
    %v1682 = vshrl.u32 %v1681, 7
    %v1683 = vsub.s32 %v677, %v1682
    %v1684 = vrot.slane %v1552, %v1683
    %v1685 = vlaneseq
    %v1686 = vshrl.u32 %v1685, 7
    %v1687 = vsub.s32 %v677, %v1686
    %v1688 = vrot.slane %v1555, %v1687
    %v1689 = vlaneseq
    %v1690 = vshrl.u32 %v1689, 7
    %v1691 = vsub.s32 %v677, %v1690
    %v1692 = vrot.slane %v1558, %v1691
    %v1693 = vlaneseq
    %v1694 = vshrl.u32 %v1693, 7
    %v1695 = vsub.s32 %v677, %v1694
    %v1696 = vrot.slane %v1561, %v1695
    %v1697 = vlaneseq
    %v1698 = vshrl.u32 %v1697, 7
    %v1699 = vsub.s32 %v677, %v1698
    %v1700 = vrot.slane %v1564, %v1699
    %v1701 = vlaneseq
    %v1702 = vshrl.u32 %v1701, 7
    %v1703 = vsub.s32 %v677, %v1702
    %v1704 = vrot.slane %v1567, %v1703
    %v1705 = vlaneseq
    %v1706 = vshrl.u32 %v1705, 7
    %v1707 = vsub.s32 %v677, %v1706
    %v1708 = vrot.slane %v1570, %v1707
    %v1709 = vlaneseq
    %v1710 = vshrl.u32 %v1709, 7
    %v1711 = vsub.s32 %v677, %v1710
    %v1712 = vrot.slane %v1573, %v1711
    %v1713 = vlaneseq
    %v1714 = vshrl.u32 %v1713, 7
    %v1715 = vsub.s32 %v677, %v1714
    %v1716 = vrot.slane %v1576, %v1715
    %v1717 = vlaneseq
    %v1718 = vshrl.u32 %v1717, 7
    %v1719 = vsub.s32 %v677, %v1718
    %v1720 = vrot.slane %v1579, %v1719
    %v1721 = vlaneseq
    %v1722 = vshrl.u32 %v1721, 7
    %v1723 = vsub.s32 %v677, %v1722
    %v1724 = vrot.slane %v1582, %v1723
    %v1725 = vlaneseq
    %v1726 = vshrl.u32 %v1725, 7
    %v1727 = vsub.s32 %v677, %v1726
    %v1728 = vrot.slane %v1585, %v1727
    %v1729 = vlaneseq
    %v1730 = vshrl.u32 %v1729, 7
    %v1731 = vsub.s32 %v677, %v1730
    %v1732 = vrot.slane %v1588, %v1731
    %v1733 = vlaneseq
    %v1734 = vshrl.u32 %v1733, 7
    %v1735 = vsub.s32 %v677, %v1734
    %v1736 = vrot.slane %v1591, %v1735
    %v1737 = vlaneseq
    %v1738 = vshrl.u32 %v1737, 7
    %v1739 = vsub.s32 %v677, %v1738
    %v1740 = vrot.slane %v1594, %v1739
    %v1741 = vlaneseq
    %v1742 = vshrl.u32 %v1741, 7
    %v1743 = vsub.s32 %v677, %v1742
    %v1744 = vrot.slane %v1597, %v1743
    %v1745 = vlaneseq
    %v1746 = vshrl.u32 %v1745, 7
    %v1747 = vsub.s32 %v677, %v1746
    %v1748 = vrot.slane %v1600, %v1747
    %v1749 = vlaneseq
    %v1750 = vshrl.u32 %v1749, 7
    %v1751 = vsub.s32 %v677, %v1750
    %v1752 = vrot.slane %v1603, %v1751
    %v1753 = vlaneseq
    %v1754 = vshrl.u32 %v1753, 7
    %v1755 = vsub.s32 %v677, %v1754
    %v1756 = vrot.slane %v1606, %v1755
    %v1757 = vlaneseq
    %v1758 = vshrl.u32 %v1757, 7
    %v1759 = vsub.s32 %v677, %v1758
    %v1760 = vrot.slane %v1609, %v1759
    %v1761 = vlaneseq
    %v1762 = vshrl.u32 %v1761, 7
    %v1763 = vsub.s32 %v677, %v1762
    %v1764 = vrot.slane %v1612, %v1763
    %v1765 = vlaneseq
    %v1766 = vshrl.u32 %v1765, 7
    %v1767 = vsub.s32 %v677, %v1766
    %v1768 = vrot.slane %v1615, %v1767
    %v1769 = vlaneseq
    %v1770 = vshrl.u32 %v1769, 7
    %v1771 = vsub.s32 %v677, %v1770
    %v1772 = vrot.slane %v1618, %v1771
    %v1773 = vlaneseq
    %v1774 = vshrl.u32 %v1773, 7
    %v1775 = vsub.s32 %v677, %v1774
    %v1776 = vrot.slane %v1621, %v1775
    %v1777 = vlaneseq
    %v1778 = vshrl.u32 %v1777, 7
    %v1779 = vsub.s32 %v677, %v1778
    %v1780 = vrot.slane %v1624, %v1779
    %v1781 = vlaneseq
    %v1782 = vshrl.u32 %v1781, 7
    %v1783 = vsub.s32 %v677, %v1782
    %v1784 = vrot.slane %v1627, %v1783
    %v1785 = vlaneseq
    %v1786 = vshrl.u32 %v1785, 7
    %v1787 = vsub.s32 %v677, %v1786
    %v1788 = vrot.slane %v1630, %v1787
    %v1789 = vlaneseq
    %v1790 = vshrl.u32 %v1789, 7
    %v1791 = vsub.s32 %v677, %v1790
    %v1792 = vrot.slane %v1633, %v1791
    %v1793 = vlaneseq
    %v1794 = vshrl.u32 %v1793, 7
    %v1795 = vsub.s32 %v677, %v1794
    %v1796 = vrot.slane %v1636, %v1795
    %v1797 = vsel %vm806, %v1676, %v1672
    %v1798 = vsel %vm808, %v1680, %v1797
    %v1799 = vsel %vm810, %v1684, %v1798
    %v1800 = vsel %vm812, %v1688, %v1799
    %v1801 = vsel %vm814, %v1692, %v1800
    %v1802 = vsel %vm816, %v1696, %v1801
    %v1803 = vsel %vm818, %v1700, %v1802
    %v1804 = vsel %vm806, %v1708, %v1704
    %v1805 = vsel %vm808, %v1712, %v1804
    %v1806 = vsel %vm810, %v1716, %v1805
    %v1807 = vsel %vm812, %v1720, %v1806
    %v1808 = vsel %vm814, %v1724, %v1807
    %v1809 = vsel %vm816, %v1728, %v1808
    %v1810 = vsel %vm818, %v1732, %v1809
    %v1811 = vsel %vm806, %v1740, %v1736
    %v1812 = vsel %vm808, %v1744, %v1811
    %v1813 = vsel %vm810, %v1748, %v1812
    %v1814 = vsel %vm812, %v1752, %v1813
    %v1815 = vsel %vm814, %v1756, %v1814
    %v1816 = vsel %vm816, %v1760, %v1815
    %v1817 = vsel %vm818, %v1764, %v1816
    %v1818 = vsel %vm806, %v1772, %v1768
    %v1819 = vsel %vm808, %v1776, %v1818
    %v1820 = vsel %vm810, %v1780, %v1819
    %v1821 = vsel %vm812, %v1784, %v1820
    %v1822 = vsel %vm814, %v1788, %v1821
    %v1823 = vsel %vm816, %v1792, %v1822
    %v1824 = vsel %vm818, %v1796, %v1823
    %v1829 = vadd.f32 %v1403, %v1803
    %v1830 = vadd.f32 %v1406, %v1810
    %v1831 = vadd.f32 %v1409, %v1817
    %v1832 = vadd.f32 %v1412, %v1824
    %vm1833 = vcmp.gt.f32.partialorder %v1829, 0.0
    %vm1834 = vcmp.gt.f32.partialorder %v1830, 0.0
    %vm1835 = vcmp.gt.f32.partialorder %v1831, 0.0
    %vm1836 = vcmp.gt.f32.partialorder %v1832, 0.0
    %v1837 = vmul.f32 %v1829, 0.2
    %v1838 = vmul.f32 %v1830, 0.2
    %v1839 = vmul.f32 %v1831, 0.2
    %v1840 = vmul.f32 %v1832, 0.2
    %v1841 = vsel %vm1833, %v1829, %v1837
    %v1842 = vsel %vm1834, %v1830, %v1838
    %v1843 = vsel %vm1835, %v1831, %v1839
    %v1844 = vsel %vm1836, %v1832, %v1840
    %v1845 = vsel %vm535, %v1841, -inf
    %1846 = vmax.xlane.f32.xlu0 %v1845
    %v1847 = vpop.xlane.xlu0 %1846
    %v1848 = vsel %vm535, %v1842, -inf
    %1849 = vmax.xlane.f32.xlu0 %v1848
    %v1850 = vpop.xlane.xlu0 %1849
    %v1851 = vsel %vm535, %v1843, -inf
    %1852 = vmax.xlane.f32.xlu0 %v1851
    %v1853 = vpop.xlane.xlu0 %1852
    %v1854 = vsel %vm535, %v1844, -inf
    %1855 = vmax.xlane.f32.xlu0 %v1854
    %v1856 = vpop.xlane.xlu0 %1855
    %v1857 = vsub.f32 %v1841, %v1847
    %v1858 = vsub.f32 %v1842, %v1850
    %v1859 = vsub.f32 %v1843, %v1853
    %v1860 = vsub.f32 %v1844, %v1856
    %v1861 = vmul.f32 %v1857, 1.442695
    %v1862 = vpow.pop %v1861
    %v1863 = vmul.f32 %v1858, 1.442695
    %v1864 = vpow.pop %v1863
    %v1865 = vmul.f32 %v1859, 1.442695
    %v1866 = vpow.pop %v1865
    %v1867 = vmul.f32 %v1860, 1.442695
    %v1868 = vpow.pop %v1867
    %v1869 = vsel %vm535, %v1862, 0.0
    %1870 = vadd.xlane.f32.xlu0 %v1869
    %v1871 = vpop.xlane.xlu0 %1870
    %v1872 = vsel %vm535, %v1864, 0.0
    %1873 = vadd.xlane.f32.xlu0 %v1872
    %v1874 = vpop.xlane.xlu0 %1873
    %v1875 = vsel %vm535, %v1866, 0.0
    %1876 = vadd.xlane.f32.xlu0 %v1875
    %v1877 = vpop.xlane.xlu0 %1876
    %v1878 = vsel %vm535, %v1868, 0.0
    %1879 = vadd.xlane.f32.xlu0 %v1878
    %v1880 = vpop.xlane.xlu0 %1879
    %v1881 = vrcp.pop %v1871
    %v1882 = vrcp.pop %v1874
    %v1883 = vrcp.pop %v1877
    %v1884 = vrcp.pop %v1880
    %v1885 = vmul.f32 %v1862, %v1881
    %v1886 = vmul.f32 %v1864, %v1882
    %v1887 = vmul.f32 %v1866, %v1883
    %v1888 = vmul.f32 %v1868, %v1884
    %v1889 = vlaneseq
    %v1890 = vshrl.u32 %v1889, 7
    %v1891 = vsub.s32 0, %v1890
    %v1892 = vrot.slane %v1885, %v1891
    %1894 = vbcast.lane.b32.xlu0 %v1892, 256
    %v1895 = vpop.permute.xlu0 %1894
    %v1896 = vlaneseq
    %v1897 = vshrl.u32 %v1896, 7
    %v1898 = vsub.s32 1, %v1897
    %v1899 = vrot.slane %v1885, %v1898
    %1901 = vbcast.lane.b32.xlu0 %v1899, 256
    %v1902 = vpop.permute.xlu0 %1901
    %v1903 = vlaneseq
    %v1904 = vshrl.u32 %v1903, 7
    %v1905 = vsub.s32 2, %v1904
    %v1906 = vrot.slane %v1885, %v1905
    %1908 = vbcast.lane.b32.xlu0 %v1906, 256
    %v1909 = vpop.permute.xlu0 %1908
    %v1910 = vlaneseq
    %v1911 = vshrl.u32 %v1910, 7
    %v1912 = vsub.s32 3, %v1911
    %v1913 = vrot.slane %v1885, %v1912
    %1915 = vbcast.lane.b32.xlu0 %v1913, 256
    %v1916 = vpop.permute.xlu0 %1915
    %v1917 = vlaneseq
    %v1918 = vshrl.u32 %v1917, 7
    %v1919 = vsub.s32 4, %v1918
    %v1920 = vrot.slane %v1885, %v1919
    %1922 = vbcast.lane.b32.xlu0 %v1920, 256
    %v1923 = vpop.permute.xlu0 %1922
    %v1924 = vlaneseq
    %v1925 = vshrl.u32 %v1924, 7
    %v1926 = vsub.s32 5, %v1925
    %v1927 = vrot.slane %v1885, %v1926
    %1929 = vbcast.lane.b32.xlu0 %v1927, 256
    %v1930 = vpop.permute.xlu0 %1929
    %v1931 = vlaneseq
    %v1932 = vshrl.u32 %v1931, 7
    %v1933 = vsub.s32 6, %v1932
    %v1934 = vrot.slane %v1885, %v1933
    %1936 = vbcast.lane.b32.xlu0 %v1934, 256
    %v1937 = vpop.permute.xlu0 %1936
    %v1938 = vlaneseq
    %v1939 = vshrl.u32 %v1938, 7
    %v1940 = vsub.s32 7, %v1939
    %v1941 = vrot.slane %v1885, %v1940
    %1943 = vbcast.lane.b32.xlu0 %v1941, 256
    %v1944 = vpop.permute.xlu0 %1943
    %v1945 = vlaneseq
    %v1946 = vshrl.u32 %v1945, 7
    %v1947 = vsub.s32 0, %v1946
    %v1948 = vrot.slane %v1886, %v1947
    %1950 = vbcast.lane.b32.xlu0 %v1948, 256
    %v1951 = vpop.permute.xlu0 %1950
    %v1952 = vlaneseq
    %v1953 = vshrl.u32 %v1952, 7
    %v1954 = vsub.s32 1, %v1953
    %v1955 = vrot.slane %v1886, %v1954
    %1957 = vbcast.lane.b32.xlu0 %v1955, 256
    %v1958 = vpop.permute.xlu0 %1957
    %v1959 = vlaneseq
    %v1960 = vshrl.u32 %v1959, 7
    %v1961 = vsub.s32 2, %v1960
    %v1962 = vrot.slane %v1886, %v1961
    %1964 = vbcast.lane.b32.xlu0 %v1962, 256
    %v1965 = vpop.permute.xlu0 %1964
    %v1966 = vlaneseq
    %v1967 = vshrl.u32 %v1966, 7
    %v1968 = vsub.s32 3, %v1967
    %v1969 = vrot.slane %v1886, %v1968
    %1971 = vbcast.lane.b32.xlu0 %v1969, 256
    %v1972 = vpop.permute.xlu0 %1971
    %v1973 = vlaneseq
    %v1974 = vshrl.u32 %v1973, 7
    %v1975 = vsub.s32 4, %v1974
    %v1976 = vrot.slane %v1886, %v1975
    %1978 = vbcast.lane.b32.xlu0 %v1976, 256
    %v1979 = vpop.permute.xlu0 %1978
    %v1980 = vlaneseq
    %v1981 = vshrl.u32 %v1980, 7
    %v1982 = vsub.s32 5, %v1981
    %v1983 = vrot.slane %v1886, %v1982
    %1985 = vbcast.lane.b32.xlu0 %v1983, 256
    %v1986 = vpop.permute.xlu0 %1985
    %v1987 = vlaneseq
    %v1988 = vshrl.u32 %v1987, 7
    %v1989 = vsub.s32 6, %v1988
    %v1990 = vrot.slane %v1886, %v1989
    %1992 = vbcast.lane.b32.xlu0 %v1990, 256
    %v1993 = vpop.permute.xlu0 %1992
    %v1994 = vlaneseq
    %v1995 = vshrl.u32 %v1994, 7
    %v1996 = vsub.s32 7, %v1995
    %v1997 = vrot.slane %v1886, %v1996
    %1999 = vbcast.lane.b32.xlu0 %v1997, 256
    %v2000 = vpop.permute.xlu0 %1999
    %v2001 = vlaneseq
    %v2002 = vshrl.u32 %v2001, 7
    %v2003 = vsub.s32 0, %v2002
    %v2004 = vrot.slane %v1887, %v2003
    %2006 = vbcast.lane.b32.xlu0 %v2004, 256
    %v2007 = vpop.permute.xlu0 %2006
    %v2008 = vlaneseq
    %v2009 = vshrl.u32 %v2008, 7
    %v2010 = vsub.s32 1, %v2009
    %v2011 = vrot.slane %v1887, %v2010
    %2013 = vbcast.lane.b32.xlu0 %v2011, 256
    %v2014 = vpop.permute.xlu0 %2013
    %v2015 = vlaneseq
    %v2016 = vshrl.u32 %v2015, 7
    %v2017 = vsub.s32 2, %v2016
    %v2018 = vrot.slane %v1887, %v2017
    %2020 = vbcast.lane.b32.xlu0 %v2018, 256
    %v2021 = vpop.permute.xlu0 %2020
    %v2022 = vlaneseq
    %v2023 = vshrl.u32 %v2022, 7
    %v2024 = vsub.s32 3, %v2023
    %v2025 = vrot.slane %v1887, %v2024
    %2027 = vbcast.lane.b32.xlu0 %v2025, 256
    %v2028 = vpop.permute.xlu0 %2027
    %v2029 = vlaneseq
    %v2030 = vshrl.u32 %v2029, 7
    %v2031 = vsub.s32 4, %v2030
    %v2032 = vrot.slane %v1887, %v2031
    %2034 = vbcast.lane.b32.xlu0 %v2032, 256
    %v2035 = vpop.permute.xlu0 %2034
    %v2036 = vlaneseq
    %v2037 = vshrl.u32 %v2036, 7
    %v2038 = vsub.s32 5, %v2037
    %v2039 = vrot.slane %v1887, %v2038
    %2041 = vbcast.lane.b32.xlu0 %v2039, 256
    %v2042 = vpop.permute.xlu0 %2041
    %v2043 = vlaneseq
    %v2044 = vshrl.u32 %v2043, 7
    %v2045 = vsub.s32 6, %v2044
    %v2046 = vrot.slane %v1887, %v2045
    %2048 = vbcast.lane.b32.xlu0 %v2046, 256
    %v2049 = vpop.permute.xlu0 %2048
    %v2050 = vlaneseq
    %v2051 = vshrl.u32 %v2050, 7
    %v2052 = vsub.s32 7, %v2051
    %v2053 = vrot.slane %v1887, %v2052
    %2055 = vbcast.lane.b32.xlu0 %v2053, 256
    %v2056 = vpop.permute.xlu0 %2055
    %v2057 = vlaneseq
    %v2058 = vshrl.u32 %v2057, 7
    %v2059 = vsub.s32 0, %v2058
    %v2060 = vrot.slane %v1888, %v2059
    %2062 = vbcast.lane.b32.xlu0 %v2060, 256
    %v2063 = vpop.permute.xlu0 %2062
    %v2064 = vlaneseq
    %v2065 = vshrl.u32 %v2064, 7
    %v2066 = vsub.s32 1, %v2065
    %v2067 = vrot.slane %v1888, %v2066
    %2069 = vbcast.lane.b32.xlu0 %v2067, 256
    %v2070 = vpop.permute.xlu0 %2069
    %v2071 = vlaneseq
    %v2072 = vshrl.u32 %v2071, 7
    %v2073 = vsub.s32 2, %v2072
    %v2074 = vrot.slane %v1888, %v2073
    %2076 = vbcast.lane.b32.xlu0 %v2074, 256
    %v2077 = vpop.permute.xlu0 %2076
    %v2078 = vlaneseq
    %v2079 = vshrl.u32 %v2078, 7
    %v2080 = vsub.s32 3, %v2079
    %v2081 = vrot.slane %v1888, %v2080
    %2083 = vbcast.lane.b32.xlu0 %v2081, 256
    %v2084 = vpop.permute.xlu0 %2083
    %v2085 = vlaneseq
    %v2086 = vshrl.u32 %v2085, 7
    %v2087 = vsub.s32 4, %v2086
    %v2088 = vrot.slane %v1888, %v2087
    %2090 = vbcast.lane.b32.xlu0 %v2088, 256
    %v2091 = vpop.permute.xlu0 %2090
    %v2092 = vlaneseq
    %v2093 = vshrl.u32 %v2092, 7
    %v2094 = vsub.s32 5, %v2093
    %v2095 = vrot.slane %v1888, %v2094
    %2097 = vbcast.lane.b32.xlu0 %v2095, 256
    %v2098 = vpop.permute.xlu0 %2097
    %v2099 = vlaneseq
    %v2100 = vshrl.u32 %v2099, 7
    %v2101 = vsub.s32 6, %v2100
    %v2102 = vrot.slane %v1888, %v2101
    %2104 = vbcast.lane.b32.xlu0 %v2102, 256
    %v2105 = vpop.permute.xlu0 %2104
    %v2106 = vlaneseq
    %v2107 = vshrl.u32 %v2106, 7
    %v2108 = vsub.s32 7, %v2107
    %v2109 = vrot.slane %v1888, %v2108
    %2111 = vbcast.lane.b32.xlu0 %v2109, 256
    %v2112 = vpop.permute.xlu0 %2111
    %v2113 = vmul.f32 %v1895, %v329
    %v2114 = vmul.f32 %v1902, %v334
    %v2115 = vmul.f32 %v1909, %v339
    %v2116 = vmul.f32 %v1916, %v344
    %v2117 = vmul.f32 %v1923, %v349
    %v2118 = vmul.f32 %v1930, %v354
    %v2119 = vmul.f32 %v1937, %v359
    %v2120 = vmul.f32 %v1944, %v364
    %v2121 = vmul.f32 %v1951, %v369
    %v2122 = vmul.f32 %v1958, %v374
    %v2123 = vmul.f32 %v1965, %v379
    %v2124 = vmul.f32 %v1972, %v384
    %v2125 = vmul.f32 %v1979, %v389
    %v2126 = vmul.f32 %v1986, %v394
    %v2127 = vmul.f32 %v1993, %v399
    %v2128 = vmul.f32 %v2000, %v404
    %v2129 = vmul.f32 %v2007, %v409
    %v2130 = vmul.f32 %v2014, %v414
    %v2131 = vmul.f32 %v2021, %v419
    %v2132 = vmul.f32 %v2028, %v424
    %v2133 = vmul.f32 %v2035, %v429
    %v2134 = vmul.f32 %v2042, %v434
    %v2135 = vmul.f32 %v2049, %v439
    %v2136 = vmul.f32 %v2056, %v444
    %v2137 = vmul.f32 %v2063, %v449
    %v2138 = vmul.f32 %v2070, %v454
    %v2139 = vmul.f32 %v2077, %v459
    %v2140 = vmul.f32 %v2084, %v464
    %v2141 = vmul.f32 %v2091, %v469
    %v2142 = vmul.f32 %v2098, %v474
    %v2143 = vmul.f32 %v2105, %v479
    %v2144 = vmul.f32 %v2112, %v484
    %vm2145 = vcmask 130112
    %v2146 = vsel %vm2145, %v2113, 0.0
    %v2147 = vrot.slane %v2146, 4
    %v2148 = vadd.f32 %v2146, %v2147
    %v2149 = vrot.slane %v2148, 2
    %v2150 = vadd.f32 %v2148, %v2149
    %v2151 = vrot.slane %v2150, 1
    %v2152 = vadd.f32 %v2150, %v2151
    %v2153 = vsel %vm2145, %v2114, 0.0
    %v2154 = vrot.slane %v2153, 4
    %v2155 = vadd.f32 %v2153, %v2154
    %v2156 = vrot.slane %v2155, 2
    %v2157 = vadd.f32 %v2155, %v2156
    %v2158 = vrot.slane %v2157, 1
    %v2159 = vadd.f32 %v2157, %v2158
    %v2160 = vsel %vm2145, %v2115, 0.0
    %v2161 = vrot.slane %v2160, 4
    %v2162 = vadd.f32 %v2160, %v2161
    %v2163 = vrot.slane %v2162, 2
    %v2164 = vadd.f32 %v2162, %v2163
    %v2165 = vrot.slane %v2164, 1
    %v2166 = vadd.f32 %v2164, %v2165
    %v2167 = vsel %vm2145, %v2116, 0.0
    %v2168 = vrot.slane %v2167, 4
    %v2169 = vadd.f32 %v2167, %v2168
    %v2170 = vrot.slane %v2169, 2
    %v2171 = vadd.f32 %v2169, %v2170
    %v2172 = vrot.slane %v2171, 1
    %v2173 = vadd.f32 %v2171, %v2172
    %v2174 = vsel %vm2145, %v2117, 0.0
    %v2175 = vrot.slane %v2174, 4
    %v2176 = vadd.f32 %v2174, %v2175
    %v2177 = vrot.slane %v2176, 2
    %v2178 = vadd.f32 %v2176, %v2177
    %v2179 = vrot.slane %v2178, 1
    %v2180 = vadd.f32 %v2178, %v2179
    %v2181 = vsel %vm2145, %v2118, 0.0
    %v2182 = vrot.slane %v2181, 4
    %v2183 = vadd.f32 %v2181, %v2182
    %v2184 = vrot.slane %v2183, 2
    %v2185 = vadd.f32 %v2183, %v2184
    %v2186 = vrot.slane %v2185, 1
    %v2187 = vadd.f32 %v2185, %v2186
    %v2188 = vsel %vm2145, %v2119, 0.0
    %v2189 = vrot.slane %v2188, 4
    %v2190 = vadd.f32 %v2188, %v2189
    %v2191 = vrot.slane %v2190, 2
    %v2192 = vadd.f32 %v2190, %v2191
    %v2193 = vrot.slane %v2192, 1
    %v2194 = vadd.f32 %v2192, %v2193
    %v2195 = vsel %vm2145, %v2120, 0.0
    %v2196 = vrot.slane %v2195, 4
    %v2197 = vadd.f32 %v2195, %v2196
    %v2198 = vrot.slane %v2197, 2
    %v2199 = vadd.f32 %v2197, %v2198
    %v2200 = vrot.slane %v2199, 1
    %v2201 = vadd.f32 %v2199, %v2200
    %v2202 = vsel %vm2145, %v2121, 0.0
    %v2203 = vrot.slane %v2202, 4
    %v2204 = vadd.f32 %v2202, %v2203
    %v2205 = vrot.slane %v2204, 2
    %v2206 = vadd.f32 %v2204, %v2205
    %v2207 = vrot.slane %v2206, 1
    %v2208 = vadd.f32 %v2206, %v2207
    %v2209 = vsel %vm2145, %v2122, 0.0
    %v2210 = vrot.slane %v2209, 4
    %v2211 = vadd.f32 %v2209, %v2210
    %v2212 = vrot.slane %v2211, 2
    %v2213 = vadd.f32 %v2211, %v2212
    %v2214 = vrot.slane %v2213, 1
    %v2215 = vadd.f32 %v2213, %v2214
    %v2216 = vsel %vm2145, %v2123, 0.0
    %v2217 = vrot.slane %v2216, 4
    %v2218 = vadd.f32 %v2216, %v2217
    %v2219 = vrot.slane %v2218, 2
    %v2220 = vadd.f32 %v2218, %v2219
    %v2221 = vrot.slane %v2220, 1
    %v2222 = vadd.f32 %v2220, %v2221
    %v2223 = vsel %vm2145, %v2124, 0.0
    %v2224 = vrot.slane %v2223, 4
    %v2225 = vadd.f32 %v2223, %v2224
    %v2226 = vrot.slane %v2225, 2
    %v2227 = vadd.f32 %v2225, %v2226
    %v2228 = vrot.slane %v2227, 1
    %v2229 = vadd.f32 %v2227, %v2228
    %v2230 = vsel %vm2145, %v2125, 0.0
    %v2231 = vrot.slane %v2230, 4
    %v2232 = vadd.f32 %v2230, %v2231
    %v2233 = vrot.slane %v2232, 2
    %v2234 = vadd.f32 %v2232, %v2233
    %v2235 = vrot.slane %v2234, 1
    %v2236 = vadd.f32 %v2234, %v2235
    %v2237 = vsel %vm2145, %v2126, 0.0
    %v2238 = vrot.slane %v2237, 4
    %v2239 = vadd.f32 %v2237, %v2238
    %v2240 = vrot.slane %v2239, 2
    %v2241 = vadd.f32 %v2239, %v2240
    %v2242 = vrot.slane %v2241, 1
    %v2243 = vadd.f32 %v2241, %v2242
    %v2244 = vsel %vm2145, %v2127, 0.0
    %v2245 = vrot.slane %v2244, 4
    %v2246 = vadd.f32 %v2244, %v2245
    %v2247 = vrot.slane %v2246, 2
    %v2248 = vadd.f32 %v2246, %v2247
    %v2249 = vrot.slane %v2248, 1
    %v2250 = vadd.f32 %v2248, %v2249
    %v2251 = vsel %vm2145, %v2128, 0.0
    %v2252 = vrot.slane %v2251, 4
    %v2253 = vadd.f32 %v2251, %v2252
    %v2254 = vrot.slane %v2253, 2
    %v2255 = vadd.f32 %v2253, %v2254
    %v2256 = vrot.slane %v2255, 1
    %v2257 = vadd.f32 %v2255, %v2256
    %v2258 = vsel %vm2145, %v2129, 0.0
    %v2259 = vrot.slane %v2258, 4
    %v2260 = vadd.f32 %v2258, %v2259
    %v2261 = vrot.slane %v2260, 2
    %v2262 = vadd.f32 %v2260, %v2261
    %v2263 = vrot.slane %v2262, 1
    %v2264 = vadd.f32 %v2262, %v2263
    %v2265 = vsel %vm2145, %v2130, 0.0
    %v2266 = vrot.slane %v2265, 4
    %v2267 = vadd.f32 %v2265, %v2266
    %v2268 = vrot.slane %v2267, 2
    %v2269 = vadd.f32 %v2267, %v2268
    %v2270 = vrot.slane %v2269, 1
    %v2271 = vadd.f32 %v2269, %v2270
    %v2272 = vsel %vm2145, %v2131, 0.0
    %v2273 = vrot.slane %v2272, 4
    %v2274 = vadd.f32 %v2272, %v2273
    %v2275 = vrot.slane %v2274, 2
    %v2276 = vadd.f32 %v2274, %v2275
    %v2277 = vrot.slane %v2276, 1
    %v2278 = vadd.f32 %v2276, %v2277
    %v2279 = vsel %vm2145, %v2132, 0.0
    %v2280 = vrot.slane %v2279, 4
    %v2281 = vadd.f32 %v2279, %v2280
    %v2282 = vrot.slane %v2281, 2
    %v2283 = vadd.f32 %v2281, %v2282
    %v2284 = vrot.slane %v2283, 1
    %v2285 = vadd.f32 %v2283, %v2284
    %v2286 = vsel %vm2145, %v2133, 0.0
    %v2287 = vrot.slane %v2286, 4
    %v2288 = vadd.f32 %v2286, %v2287
    %v2289 = vrot.slane %v2288, 2
    %v2290 = vadd.f32 %v2288, %v2289
    %v2291 = vrot.slane %v2290, 1
    %v2292 = vadd.f32 %v2290, %v2291
    %v2293 = vsel %vm2145, %v2134, 0.0
    %v2294 = vrot.slane %v2293, 4
    %v2295 = vadd.f32 %v2293, %v2294
    %v2296 = vrot.slane %v2295, 2
    %v2297 = vadd.f32 %v2295, %v2296
    %v2298 = vrot.slane %v2297, 1
    %v2299 = vadd.f32 %v2297, %v2298
    %v2300 = vsel %vm2145, %v2135, 0.0
    %v2301 = vrot.slane %v2300, 4
    %v2302 = vadd.f32 %v2300, %v2301
    %v2303 = vrot.slane %v2302, 2
    %v2304 = vadd.f32 %v2302, %v2303
    %v2305 = vrot.slane %v2304, 1
    %v2306 = vadd.f32 %v2304, %v2305
    %v2307 = vsel %vm2145, %v2136, 0.0
    %v2308 = vrot.slane %v2307, 4
    %v2309 = vadd.f32 %v2307, %v2308
    %v2310 = vrot.slane %v2309, 2
    %v2311 = vadd.f32 %v2309, %v2310
    %v2312 = vrot.slane %v2311, 1
    %v2313 = vadd.f32 %v2311, %v2312
    %v2314 = vsel %vm2145, %v2137, 0.0
    %v2315 = vrot.slane %v2314, 4
    %v2316 = vadd.f32 %v2314, %v2315
    %v2317 = vrot.slane %v2316, 2
    %v2318 = vadd.f32 %v2316, %v2317
    %v2319 = vrot.slane %v2318, 1
    %v2320 = vadd.f32 %v2318, %v2319
    %v2321 = vsel %vm2145, %v2138, 0.0
    %v2322 = vrot.slane %v2321, 4
    %v2323 = vadd.f32 %v2321, %v2322
    %v2324 = vrot.slane %v2323, 2
    %v2325 = vadd.f32 %v2323, %v2324
    %v2326 = vrot.slane %v2325, 1
    %v2327 = vadd.f32 %v2325, %v2326
    %v2328 = vsel %vm2145, %v2139, 0.0
    %v2329 = vrot.slane %v2328, 4
    %v2330 = vadd.f32 %v2328, %v2329
    %v2331 = vrot.slane %v2330, 2
    %v2332 = vadd.f32 %v2330, %v2331
    %v2333 = vrot.slane %v2332, 1
    %v2334 = vadd.f32 %v2332, %v2333
    %v2335 = vsel %vm2145, %v2140, 0.0
    %v2336 = vrot.slane %v2335, 4
    %v2337 = vadd.f32 %v2335, %v2336
    %v2338 = vrot.slane %v2337, 2
    %v2339 = vadd.f32 %v2337, %v2338
    %v2340 = vrot.slane %v2339, 1
    %v2341 = vadd.f32 %v2339, %v2340
    %v2342 = vsel %vm2145, %v2141, 0.0
    %v2343 = vrot.slane %v2342, 4
    %v2344 = vadd.f32 %v2342, %v2343
    %v2345 = vrot.slane %v2344, 2
    %v2346 = vadd.f32 %v2344, %v2345
    %v2347 = vrot.slane %v2346, 1
    %v2348 = vadd.f32 %v2346, %v2347
    %v2349 = vsel %vm2145, %v2142, 0.0
    %v2350 = vrot.slane %v2349, 4
    %v2351 = vadd.f32 %v2349, %v2350
    %v2352 = vrot.slane %v2351, 2
    %v2353 = vadd.f32 %v2351, %v2352
    %v2354 = vrot.slane %v2353, 1
    %v2355 = vadd.f32 %v2353, %v2354
    %v2356 = vsel %vm2145, %v2143, 0.0
    %v2357 = vrot.slane %v2356, 4
    %v2358 = vadd.f32 %v2356, %v2357
    %v2359 = vrot.slane %v2358, 2
    %v2360 = vadd.f32 %v2358, %v2359
    %v2361 = vrot.slane %v2360, 1
    %v2362 = vadd.f32 %v2360, %v2361
    %v2363 = vsel %vm2145, %v2144, 0.0
    %v2364 = vrot.slane %v2363, 4
    %v2365 = vadd.f32 %v2363, %v2364
    %v2366 = vrot.slane %v2365, 2
    %v2367 = vadd.f32 %v2365, %v2366
    %v2368 = vrot.slane %v2367, 1
    %v2369 = vadd.f32 %v2367, %v2368
    %v2402 = vsel %vm806, %v1174, %v1167
    %v2403 = vsel %vm808, %v1181, %v2402
    %v2404 = vsel %vm810, %v1188, %v2403
    %v2405 = vsel %vm812, %v1195, %v2404
    %v2406 = vsel %vm814, %v1202, %v2405
    %v2407 = vsel %vm816, %v1209, %v2406
    %v2408 = vsel %vm818, %v1216, %v2407
    %v2409 = vsel %vm806, %v1230, %v1223
    %v2410 = vsel %vm808, %v1237, %v2409
    %v2411 = vsel %vm810, %v1244, %v2410
    %v2412 = vsel %vm812, %v1251, %v2411
    %v2413 = vsel %vm814, %v1258, %v2412
    %v2414 = vsel %vm816, %v1265, %v2413
    %v2415 = vsel %vm818, %v1272, %v2414
    %v2416 = vsel %vm806, %v1286, %v1279
    %v2417 = vsel %vm808, %v1293, %v2416
    %v2418 = vsel %vm810, %v1300, %v2417
    %v2419 = vsel %vm812, %v1307, %v2418
    %v2420 = vsel %vm814, %v1314, %v2419
    %v2421 = vsel %vm816, %v1321, %v2420
    %v2422 = vsel %vm818, %v1328, %v2421
    %v2423 = vsel %vm806, %v1342, %v1335
    %v2424 = vsel %vm808, %v1349, %v2423
    %v2425 = vsel %vm810, %v1356, %v2424
    %v2426 = vsel %vm812, %v1363, %v2425
    %v2427 = vsel %vm814, %v1370, %v2426
    %v2428 = vsel %vm816, %v1377, %v2427
    %v2429 = vsel %vm818, %v1384, %v2428
    %v2466 = vsel %vm806, %v2159, %v2152
    %v2467 = vsel %vm808, %v2166, %v2466
    %v2468 = vsel %vm810, %v2173, %v2467
    %v2469 = vsel %vm812, %v2180, %v2468
    %v2470 = vsel %vm814, %v2187, %v2469
    %v2471 = vsel %vm816, %v2194, %v2470
    %v2472 = vsel %vm818, %v2201, %v2471
    %v2473 = vsel %vm806, %v2215, %v2208
    %v2474 = vsel %vm808, %v2222, %v2473
    %v2475 = vsel %vm810, %v2229, %v2474
    %v2476 = vsel %vm812, %v2236, %v2475
    %v2477 = vsel %vm814, %v2243, %v2476
    %v2478 = vsel %vm816, %v2250, %v2477
    %v2479 = vsel %vm818, %v2257, %v2478
    %v2480 = vsel %vm806, %v2271, %v2264
    %v2481 = vsel %vm808, %v2278, %v2480
    %v2482 = vsel %vm810, %v2285, %v2481
    %v2483 = vsel %vm812, %v2292, %v2482
    %v2484 = vsel %vm814, %v2299, %v2483
    %v2485 = vsel %vm816, %v2306, %v2484
    %v2486 = vsel %vm818, %v2313, %v2485
    %v2487 = vsel %vm806, %v2327, %v2320
    %v2488 = vsel %vm808, %v2334, %v2487
    %v2489 = vsel %vm810, %v2341, %v2488
    %v2490 = vsel %vm812, %v2348, %v2489
    %v2491 = vsel %vm814, %v2355, %v2490
    %v2492 = vsel %vm816, %v2362, %v2491
    %v2493 = vsel %vm818, %v2369, %v2492
    %v2498 = vsel %vm535, %v2408, %v2472
    %v2499 = vsel %vm535, %v2415, %v2479
    %v2500 = vsel %vm535, %v2422, %v2486
    %v2501 = vsel %vm535, %v2429, %v2493
    %vm2502 = vcmp.gt.f32.partialorder %v147, 0.0
    %vm2503 = vcmp.gt.f32.partialorder %v152, 0.0
    %vm2504 = vcmp.gt.f32.partialorder %v157, 0.0
    %vm2505 = vcmp.gt.f32.partialorder %v162, 0.0
    %v2506 = vmul.f32 %v147, 1.442695
    %v2507 = vpow.pop %v2506
    %v2508 = vmul.f32 %v152, 1.442695
    %v2509 = vpow.pop %v2508
    %v2510 = vmul.f32 %v157, 1.442695
    %v2511 = vpow.pop %v2510
    %v2512 = vmul.f32 %v162, 1.442695
    %v2513 = vpow.pop %v2512
    %v2514 = vsub.f32 %v2507, 1.0
    %v2515 = vsub.f32 %v2509, 1.0
    %v2516 = vsub.f32 %v2511, 1.0
    %v2517 = vsub.f32 %v2513, 1.0
    %v2518 = vsel %vm2502, %v147, %v2514
    %v2519 = vsel %vm2503, %v152, %v2515
    %v2520 = vsel %vm2504, %v157, %v2516
    %v2521 = vsel %vm2505, %v162, %v2517
    %vm2522 = vcmp.gt.f32.partialorder %v2498, 0.0
    %vm2523 = vcmp.gt.f32.partialorder %v2499, 0.0
    %vm2524 = vcmp.gt.f32.partialorder %v2500, 0.0
    %vm2525 = vcmp.gt.f32.partialorder %v2501, 0.0
    %v2526 = vmul.f32 %v2498, 1.442695
    %v2527 = vpow.pop %v2526
    %v2528 = vmul.f32 %v2499, 1.442695
    %v2529 = vpow.pop %v2528
    %v2530 = vmul.f32 %v2500, 1.442695
    %v2531 = vpow.pop %v2530
    %v2532 = vmul.f32 %v2501, 1.442695
    %v2533 = vpow.pop %v2532
    %v2534 = vsub.f32 %v2527, 1.0
    %v2535 = vsub.f32 %v2529, 1.0
    %v2536 = vsub.f32 %v2531, 1.0
    %v2537 = vsub.f32 %v2533, 1.0
    %v2538 = vsel %vm2522, %v2498, %v2534
    %v2539 = vsel %vm2523, %v2499, %v2535
    %v2540 = vsel %vm2524, %v2500, %v2536
    %v2541 = vsel %vm2525, %v2501, %v2537
    %2546 = vrot.lane.b32.xlu0 %v2538, 16
    %v2547 = vpop.permute.xlu0 %2546
    %2548 = vrot.lane.b32.xlu0 %v2539, 16
    %v2549 = vpop.permute.xlu0 %2548
    %2550 = vrot.lane.b32.xlu0 %v2540, 16
    %v2551 = vpop.permute.xlu0 %2550
    %2552 = vrot.lane.b32.xlu0 %v2541, 16
    %v2553 = vpop.permute.xlu0 %2552
    %v2558 = vsel %vm67, %v2518, %v2547
    %v2559 = vsel %vm67, %v2519, %v2549
    %v2560 = vsel %vm67, %v2520, %v2551
    %v2561 = vsel %vm67, %v2521, %v2553
    %vm2562 = vcmask 261120
    %2563 = vst.msk [vmem:[#allocation2] sm:$0xff] %vm2562, %v2558
    %2564 = vst.msk [vmem:[#allocation2 + $0x8] sm:$0xff] %vm2562, %v2559
    %2565 = vst.msk [vmem:[#allocation2 + $0x10] sm:$0xff] %vm2562, %v2560
    %2566 = vst.msk [vmem:[#allocation2 + $0x18] sm:$0xff] %vm2562, %v2561
    // Predicated region
    $region26: #{tpu_custom_call.1} parent=1 // pred_check
      _
    $region27: #{tpu_custom_call.1} parent=1 // pred_check_branch
      %2568 = sbr.rel (0) target = $region29
    $region28: #{tpu_custom_call.1} parent=1 // pred_region
      %s2570 = ssub.s32 512, 512
      %2571 = vsyncadd [#allocation3], %s2570
      %s2572 = sshll.u32 [#allocation2], 4
      %s2573 = int_to_ptr.vmem [resolvable:$true] %s2572
      %2578 = dma.vmem_to_hbm [thread:$0]  %s2573, 512, %s6, [#allocation3], 128, 128, 8
    $region29: #{tpu_custom_call.1} parent=1 // pred_fallthru
      _
    // Predicated region
    $region30: #{tpu_custom_call.1} parent=1 // pred_check
      _
    $region31: #{tpu_custom_call.1} parent=1 // pred_check_branch
      %2580 = sbr.rel (0) target = $region33
    $region32: #{tpu_custom_call.1} parent=1 // pred_region
      %2581 = dma.done [#allocation3], 512
    $region33: #{tpu_custom_call.1} parent=1 // pred_fallthru
      _
    %2582 = vsyncpa [#allocation3], 1

</llo_original>
